<compile_context>
chip_gen: v7x
topology: tpu7x:2x2x1
jax: 0.10.0
libtpu: 0.0.40
codegen_flags: <defaults>
</compile_context>

<pallas_src>
import functools

import jax
import jax.numpy as jnp
from jax.experimental import pallas as pl
from jax.experimental.pallas import tpu as pltpu

# ---------------- small synthetic config (real model in parentheses) --------
B = 2            # images (each a bilateral pair)
C = 4            # backbone channels per branch (real: 256; concat -> 512)
H = W = 16       # feature-map spatial size
POOL = 7         # RoIAlign output size  -> in_channels = 2*C*7*7 (real 512*7*7)
REP = 32         # representation_size   (real: 1024)
NUM_CLASSES = 5  # box_predictor classes
R = 8            # number of proposals (ROIs)
K = C * POOL * POOL          # per-branch flattened pooled size
NPRED = NUM_CLASSES * 5      # cls_score (5) + bbox_pred (20) fused


def _round_up(x, m):
    return (x + m - 1) // m * m


def _choose_tk(k, tk):
    """Multiple-of-128 K tile no larger than the 128-padded per-branch K."""
    tk = max(128, (tk // 128) * 128)
    return min(tk, _round_up(k, 128))


# ---------------- one-time weight preparation (hoisted out of hot path) -----
def prepare_params(raw, *, tk=1024):
    """Split fc6 weight into bilateral halves, zero-pad to TPU-friendly
    shapes and cast to bf16 ONCE.  The per-call wrapper does no weight
    padding/casting (at real scale that alone costs ~150 MB HBM per call)."""
    tk = _choose_tk(K, tk)
    kp = _round_up(K, tk)
    repp = _round_up(REP, 128)
    npp = _round_up(NPRED, 128)

    def pad2(a, rows, cols, dtype):
        out = jnp.zeros((rows, cols), dtype)
        return out.at[:a.shape[0], :a.shape[1]].set(a.astype(dtype))

    w6 = raw["w6"]                                   # [2K, REP]
    wp_raw = jnp.concatenate([raw["wc"], raw["wr"]], axis=1)   # [REP, NPRED]
    bp_raw = jnp.concatenate([raw["bc"], raw["br"]], axis=1)   # [1, NPRED]
    return {
        "w6x": pad2(w6[:K], kp, repp, jnp.bfloat16),   # x-branch half of fc6
        "w6y": pad2(w6[K:], kp, repp, jnp.bfloat16),   # y-branch half of fc6
        "b6": pad2(raw["b6"], 1, repp, jnp.float32),
        "w7": pad2(raw["w7"], repp, repp, jnp.bfloat16),
        "b7": pad2(raw["b7"], 1, repp, jnp.float32),
        "wp": pad2(wp_raw, repp, npp, jnp.bfloat16),
        "bp": pad2(bp_raw, 1, npp, jnp.float32),
    }


# ---------------- Pallas fused concat-fold + TwoMLPHead + predictor ---------
def _bilateral_head_kernel(x_ref, y_ref, w6x_ref, w6y_ref, b6_ref,
                           w7_ref, b7_ref, wp_ref, bp_ref, out_ref, acc_ref):
    # Grid = (roi_tiles [parallel], k_tiles [arbitrary, last]).
    k = pl.program_id(1)

    @pl.when(k == 0)
    def _():
        acc_ref[...] = jnp.zeros_like(acc_ref)

    # fc6 contraction over the concatenated feature axis, streamed over K
    # tiles of BOTH bilateral branches (concat folded into the reduction).
    acc_ref[...] += jnp.dot(x_ref[...], w6x_ref[...],
                            preferred_element_type=jnp.float32)
    acc_ref[...] += jnp.dot(y_ref[...], w6y_ref[...],
                            preferred_element_type=jnp.float32)

    @pl.when(k == pl.num_programs(1) - 1)
    def _():
        h6 = jnp.maximum(acc_ref[...] + b6_ref[...], 0.0)       # relu(fc6(z))
        h7 = jnp.dot(h6.astype(jnp.bfloat16), w7_ref[...],
                     preferred_element_type=jnp.float32) + b7_ref[...]
        h7 = jnp.maximum(h7, 0.0)                                # relu(fc7(.))
        # Fused cls_score + bbox_pred: one lane-dense (128-wide) store.
        out_ref[...] = (jnp.dot(h7.astype(jnp.bfloat16), wp_ref[...],
                                preferred_element_type=jnp.float32)
                        + bp_ref[...])


def _vmem_budget_bytes(tm, tk, repp, npp):
    bf2, f4 = 2, 4
    stream_act = 2 * (tm * tk * bf2) * 2            # x,y tiles, double-buffered
    stream_w6 = 2 * (tk * repp * bf2) * 2           # w6x,w6y tiles, dbl-buffered
    resident = 2 * (repp * repp * bf2 + repp * npp * bf2
                    + 2 * repp * f4 + npp * f4)     # w7, wp, biases
    acc = tm * repp * f4
    out = 2 * (tm * npp * f4)
    total = stream_act + stream_w6 + resident + acc + out + (4 << 20)
    # Cap at 48 MiB: safe on v7x (64 MiB physical VMEM), fine on v5e/v6e.
    return int(min(max(total, 8 << 20), 48 << 20))


def bilateral_head(x_flat, y_flat, params, *, tm=256, tk=1024):
    """x_flat/y_flat: [R, K] pooled+flattened features from backbone1/backbone2.
    params: output of prepare_params (pre-padded, pre-cast bf16 weights).

    tm: ROI tile.  256 default; on v6e push as tall as the proposal count
        allows; on v7x prefer tm such that the ROI-tile count is even so the
        parallel axis shards across both TensorCores.
    tk: K-reduction tile (1024-2048 at the real K=512*49)."""
    n_rois, k_in = x_flat.shape

    kp, repp = params["w6x"].shape
    npp = params["wp"].shape[1]

    tm = max(8, (tm // 8) * 8)
    rp = _round_up(n_rois, tm)                      # no dropped remainder ROIs

    # tk: multiple of 128 that divides the (pre-padded) kp.
    tk = max(128, (min(tk, kp) // 128) * 128)
    while kp % tk:
        tk -= 128

    # Per-call activation prep only (cheap: proportional to #ROIs, not weights).
    # Zero pad rows/cols -> exact results on the valid slice.
    xp = jnp.zeros((rp, kp), jnp.bfloat16).at[:n_rois, :k_in].set(
        x_flat.astype(jnp.bfloat16))
    yp = jnp.zeros((rp, kp), jnp.bfloat16).at[:n_rois, :k_in].set(
        y_flat.astype(jnp.bfloat16))

    roi_tile = lambda i, k: (i, 0)     # per-ROI-tile, resident across K
    kslab = lambda i, k: (k, 0)        # fc6 weight halves streamed over K
    act = lambda i, k: (i, k)          # activations tiled over (ROI, K)
    full = lambda i, k: (0, 0)         # small k-invariant weights resident
    # NOTE: the k-invariant blocks (w7/wp/biases) could be single-buffered via
    # pipeline_mode=pl.Buffered(1) to save a few MiB of VMEM at REP=1024.

    flops = (2 * rp * (2 * kp) * repp + 2 * rp * repp * repp
             + 2 * rp * repp * npp)
    bytes_accessed = (2 * kp * repp * 2 * (rp // tm)      # w6 streamed per ROI tile
                      + 2 * rp * kp * 2                   # x/y activations
                      + (repp * repp + repp * npp) * 2    # resident weights
                      + rp * npp * 4)                     # output

    out = pl.pallas_call(
        _bilateral_head_kernel,
        out_shape=jax.ShapeDtypeStruct((rp, npp), jnp.float32),
        grid=(rp // tm, kp // tk),
        in_specs=[
            pl.BlockSpec((tm, tk), act),                 # x pooled features
            pl.BlockSpec((tm, tk), act),                 # y pooled features
            pl.BlockSpec((tk, repp), kslab),             # fc6 weight, x half
            pl.BlockSpec((tk, repp), kslab),             # fc6 weight, y half
            pl.BlockSpec((1, repp), full),               # fc6 bias
            pl.BlockSpec((repp, repp), full),            # fc7 weight
            pl.BlockSpec((1, repp), full),               # fc7 bias
            pl.BlockSpec((repp, npp), full),             # fused predictor W
            pl.BlockSpec((1, npp), full),                # fused predictor b
        ],
        out_specs=pl.BlockSpec((tm, npp), roi_tile),
        scratch_shapes=[pltpu.VMEM((tm, repp), jnp.float32)],  # fc6 accumulator
        compiler_params=pltpu.CompilerParams(
            dimension_semantics=("parallel", "arbitrary"),
            vmem_limit_bytes=_vmem_budget_bytes(tm, tk, repp, npp),
        ),
        cost_estimate=pl.CostEstimate(
            flops=int(flops), transcendentals=0,
            bytes_accessed=int(bytes_accessed)),
    )(xp, yp, params["w6x"], params["w6y"], params["b6"],
      params["w7"], params["b7"], params["wp"], params["bp"])

    scores = out[:n_rois, :NUM_CLASSES]
    deltas = out[:n_rois, NUM_CLASSES:NPRED]
    return scores, deltas


# ---------------- glue: simplified RoIAlign (data-dependent gather) ---------
def roi_align(feats_per_roi, boxes):
    """feats_per_roi: [R, C, H, W] (feature of the image each ROI belongs to),
    boxes: [R, 4] (x1, y1, x2, y2) in feature-map coords (spatial_scale=1).
    Returns [R, C, POOL, POOL]. sampling_ratio=1 (bin centers), bilinear."""
    # TODO(synk): torchvision MultiScaleRoIAlign level assignment is not modeled.
    def one(feat, box):
        x1, y1, x2, y2 = box[0], box[1], box[2], box[3]
        bw = (x2 - x1) / POOL
        bh = (y2 - y1) / POOL
        cx = x1 + (jnp.arange(POOL, dtype=jnp.float32) + 0.5) * bw
        cy = y1 + (jnp.arange(POOL, dtype=jnp.float32) + 0.5) * bh
        yy, xx = jnp.meshgrid(cy, cx, indexing="ij")

        def samp(yv, xv):
            yv = jnp.clip(yv, 0.0, H - 1.0)
            xv = jnp.clip(xv, 0.0, W - 1.0)
            y0 = jnp.floor(yv).astype(jnp.int32)
            x0 = jnp.floor(xv).astype(jnp.int32)
            y1i = jnp.minimum(y0 + 1, H - 1)
            x1i = jnp.minimum(x0 + 1, W - 1)
            ly = yv - y0
            lx = xv - x0
            v00 = feat[:, y0, x0]
            v01 = feat[:, y0, x1i]
            v10 = feat[:, y1i, x0]
            v11 = feat[:, y1i, x1i]
            return ((1 - ly) * (1 - lx) * v00 + (1 - ly) * lx * v01
                    + ly * (1 - lx) * v10 + ly * lx * v11)

        vals = jax.vmap(jax.vmap(samp))(yy, xx)        # [POOL, POOL, C]
        return jnp.transpose(vals, (2, 0, 1))          # [C, POOL, POOL]

    return jax.vmap(one)(feats_per_roi, boxes)


def bilateral_roi_heads(features1, features2, boxes, batch_idx, params,
                        *, tm=256, tk=1024):
    """Mirrors RoIpool.forward + TwoMLPHead.forward + box_predictor.

    features1/features2: [B, C, H, W]   (outputs of the two frozen backbones)
    boxes: [R, 4], batch_idx: [R]       (RPN proposals; RPN itself is glue)
    """
    x = roi_align(features1[batch_idx], boxes)                 # box_roi_pool1
    y = roi_align(features2[batch_idx], boxes)                 # box_roi_pool2
    # z = torch.cat((x, y), dim=1); z.flatten(1) -> folded into the kernel's
    # fc6 K-reduction (x/y streamed against the two fc6 weight halves).
    x_flat = x.reshape(x.shape[0], -1)                         # [R, C*7*7]
    y_flat = y.reshape(y.shape[0], -1)
    return bilateral_head(x_flat, y_flat, params, tm=tm, tk=tk)


# ---------------- deterministic parameter init -------------------------------
def init_params(key):
    ks = jax.random.split(key, 8)
    s = 0.05
    return {
        # nn.Linear stores [out, in]; we keep [in, out] so the kernel does x @ W.
        "w6": s * jax.random.normal(ks[0], (2 * K, REP), jnp.float32),
        "b6": s * jax.random.normal(ks[1], (1, REP), jnp.float32),
        "w7": s * jax.random.normal(ks[2], (REP, REP), jnp.float32),
        "b7": s * jax.random.normal(ks[3], (1, REP), jnp.float32),
        "wc": s * jax.random.normal(ks[4], (REP, NUM_CLASSES), jnp.float32),
        "bc": s * jax.random.normal(ks[5], (1, NUM_CLASSES), jnp.float32),
        "wr": s * jax.random.normal(ks[6], (REP, NUM_CLASSES * 4), jnp.float32),
        "br": s * jax.random.normal(ks[7], (1, NUM_CLASSES * 4), jnp.float32),
    }


# ---------------- pure-JAX reference of the head (for a sanity check) --------
def head_reference(x_flat, y_flat, p):
    # Emulates the kernel's numerics: bf16 operands, f32 accumulation.
    f32 = lambda a: a.astype(jnp.bfloat16).astype(jnp.float32)
    z = f32(jnp.concatenate([x_flat, y_flat], axis=1))
    h6 = jax.nn.relu(z @ f32(p["w6"]) + p["b6"])
    h7 = jax.nn.relu(f32(h6) @ f32(p["w7"]) + p["b7"])
    h7 = f32(h7)
    return h7 @ f32(p["wc"]) + p["bc"], h7 @ f32(p["wr"]) + p["br"]


if __name__ == "__main__":
    key = jax.random.PRNGKey(0)
    k_f1, k_f2, k_bx, k_p = jax.random.split(key, 4)

    # synthetic backbone outputs for the two bilateral views
    features1 = jax.random.normal(k_f1, (B, C, H, W), jnp.float32)
    features2 = jax.random.normal(k_f2, (B, C, H, W), jnp.float32)

    # synthetic RPN proposals (feature-map coords), 4 per image
    k1, k2 = jax.random.split(k_bx)
    xy1 = jax.random.uniform(k1, (R, 2), minval=0.0, maxval=8.0)
    wh = jax.random.uniform(k2, (R, 2), minval=2.0, maxval=7.0)
    boxes = jnp.concatenate([xy1, xy1 + wh], axis=1).astype(jnp.float32)  # [R, 4]
    batch_idx = jnp.array([0, 0, 0, 0, 1, 1, 1, 1], dtype=jnp.int32)

    raw_params = init_params(k_p)
    params = prepare_params(raw_params, tk=1024)   # one-time pad/cast (cold path)

    fwd = jax.jit(functools.partial(bilateral_roi_heads, params=params,
                                    tm=256, tk=1024))
    scores, deltas = fwd(features1, features2, boxes, batch_idx)
    jax.block_until_ready((scores, deltas))

    # correctness check of the Pallas hot path against pure JAX
    xf = roi_align(features1[batch_idx], boxes).reshape(R, -1)
    yf = roi_align(features2[batch_idx], boxes).reshape(R, -1)
    ref_scores, ref_deltas = head_reference(xf, yf, raw_params)
    assert scores.shape == (R, NUM_CLASSES) and deltas.shape == (R, NUM_CLASSES * 4)
    assert jnp.allclose(scores, ref_scores, atol=2e-3, rtol=2e-2)
    assert jnp.allclose(deltas, ref_deltas, atol=2e-3, rtol=2e-2)

    print("KERNEL_OK")
</pallas_src>

<mosaic_0001>
module attributes {stable_mosaic.version = 11 : i64} {
  func.func @_bilateral_head_kernel(%arg0: i32, %arg1: i32, %arg2: memref<256x256xbf16, #tpu.memory_space<vmem>>, %arg3: memref<256x256xbf16, #tpu.memory_space<vmem>>, %arg4: memref<256x128xbf16, #tpu.memory_space<vmem>>, %arg5: memref<256x128xbf16, #tpu.memory_space<vmem>>, %arg6: memref<1x128xf32, #tpu.memory_space<vmem>>, %arg7: memref<128x128xbf16, #tpu.memory_space<vmem>>, %arg8: memref<1x128xf32, #tpu.memory_space<vmem>>, %arg9: memref<128x128xbf16, #tpu.memory_space<vmem>>, %arg10: memref<1x128xf32, #tpu.memory_space<vmem>>, %arg11: memref<256x128xf32, #tpu.memory_space<vmem>>, %arg12: memref<256x128xf32, #tpu.memory_space<vmem>>) attributes {dimension_semantics = [#tpu.dimension_semantics<parallel>, #tpu.dimension_semantics<arbitrary>], iteration_bounds = array<i64: 1, 1>, scalar_prefetch = 0 : i64, scratch_operands = 1 : i64, tpu.core_type = #tpu.core_type<tc>, window_params = [{transform_indices = @transform_0, window_bounds = array<i64: 256, 256>}, {transform_indices = @transform_1, window_bounds = array<i64: 256, 256>}, {transform_indices = @transform_2, window_bounds = array<i64: 256, 128>}, {transform_indices = @transform_3, window_bounds = array<i64: 256, 128>}, {pipeline_mode = #tpu.pipeline_mode<synchronous>, transform_indices = @transform_4, window_bounds = array<i64: 1, 128>}, {pipeline_mode = #tpu.pipeline_mode<synchronous>, transform_indices = @transform_5, window_bounds = array<i64: 128, 128>}, {pipeline_mode = #tpu.pipeline_mode<synchronous>, transform_indices = @transform_6, window_bounds = array<i64: 1, 128>}, {pipeline_mode = #tpu.pipeline_mode<synchronous>, transform_indices = @transform_7, window_bounds = array<i64: 128, 128>}, {pipeline_mode = #tpu.pipeline_mode<synchronous>, transform_indices = @transform_8, window_bounds = array<i64: 1, 128>}, {transform_indices = @transform_9, window_bounds = array<i64: 256, 128>}]} {
    %c0_i32 = arith.constant 0 : i32
    %0 = arith.cmpi eq, %arg1, %c0_i32 : i32
    %1 = arith.extui %0 : i1 to i32
    %c0_i32_0 = arith.constant 0 : i32
    %2 = arith.cmpi ne, %1, %c0_i32_0 : i32
    scf.if %2 {
      %cst_19 = arith.constant 0.000000e+00 : f32
      %18 = vector.broadcast %cst_19 : f32 to vector<256x128xf32>
      %c0_20 = arith.constant 0 : index
      %c0_21 = arith.constant 0 : index
      %19 = vector.load %arg12[%c0_20, %c0_21] : memref<256x128xf32, #tpu.memory_space<vmem>>, vector<256x128xf32>
      tpu.vector_store %arg12[%c0_20, %c0_21], %18 {strides = array<i32>} : memref<256x128xf32, #tpu.memory_space<vmem>>, vector<256x128xf32>,
    } else {
    }
    %c0 = arith.constant 0 : index
    %c0_1 = arith.constant 0 : index
    %3 = vector.load %arg12[%c0, %c0_1] : memref<256x128xf32, #tpu.memory_space<vmem>>, vector<256x128xf32>
    %c0_2 = arith.constant 0 : index
    %c0_3 = arith.constant 0 : index
    %4 = vector.load %arg2[%c0_2, %c0_3] : memref<256x256xbf16, #tpu.memory_space<vmem>>, vector<256x256xbf16>
    %c0_4 = arith.constant 0 : index
    %c0_5 = arith.constant 0 : index
    %5 = vector.load %arg4[%c0_4, %c0_5] : memref<256x128xbf16, #tpu.memory_space<vmem>>, vector<256x128xbf16>
    %cst = arith.constant dense<0.000000e+00> : vector<256x128xf32>
    %6 = tpu.matmul %4, %5, %cst {dimension_numbers = #tpu.dot_dimension_numbers<[1], [0], [0], [1], [0, 0, 1, 1], [], []>} : vector<256x256xbf16>, vector<256x128xbf16>, vector<256x128xf32> -> vector<256x128xf32>
    %7 = arith.addf %3, %6 : vector<256x128xf32>
    %c0_6 = arith.constant 0 : index
    %c0_7 = arith.constant 0 : index
    %8 = vector.load %arg12[%c0_6, %c0_7] : memref<256x128xf32, #tpu.memory_space<vmem>>, vector<256x128xf32>
    tpu.vector_store %arg12[%c0_6, %c0_7], %7 {strides = array<i32>} : memref<256x128xf32, #tpu.memory_space<vmem>>, vector<256x128xf32>,
    %c0_8 = arith.constant 0 : index
    %c0_9 = arith.constant 0 : index
    %9 = vector.load %arg12[%c0_8, %c0_9] : memref<256x128xf32, #tpu.memory_space<vmem>>, vector<256x128xf32>
    %c0_10 = arith.constant 0 : index
    %c0_11 = arith.constant 0 : index
    %10 = vector.load %arg3[%c0_10, %c0_11] : memref<256x256xbf16, #tpu.memory_space<vmem>>, vector<256x256xbf16>
    %c0_12 = arith.constant 0 : index
    %c0_13 = arith.constant 0 : index
    %11 = vector.load %arg5[%c0_12, %c0_13] : memref<256x128xbf16, #tpu.memory_space<vmem>>, vector<256x128xbf16>
    %cst_14 = arith.constant dense<0.000000e+00> : vector<256x128xf32>
    %12 = tpu.matmul %10, %11, %cst_14 {dimension_numbers = #tpu.dot_dimension_numbers<[1], [0], [0], [1], [0, 0, 1, 1], [], []>} : vector<256x256xbf16>, vector<256x128xbf16>, vector<256x128xf32> -> vector<256x128xf32>
    %13 = arith.addf %9, %12 : vector<256x128xf32>
    %c0_15 = arith.constant 0 : index
    %c0_16 = arith.constant 0 : index
    %14 = vector.load %arg12[%c0_15, %c0_16] : memref<256x128xf32, #tpu.memory_space<vmem>>, vector<256x128xf32>
    tpu.vector_store %arg12[%c0_15, %c0_16], %13 {strides = array<i32>} : memref<256x128xf32, #tpu.memory_space<vmem>>, vector<256x128xf32>,
    %c0_i32_17 = arith.constant 0 : i32
    %15 = arith.cmpi eq, %arg1, %c0_i32_17 : i32
    %16 = arith.extui %15 : i1 to i32
    %c0_i32_18 = arith.constant 0 : i32
    %17 = arith.cmpi ne, %16, %c0_i32_18 : i32
    scf.if %17 {
      %c0_19 = arith.constant 0 : index
      %c0_20 = arith.constant 0 : index
      %18 = vector.load %arg12[%c0_19, %c0_20] : memref<256x128xf32, #tpu.memory_space<vmem>>, vector<256x128xf32>
      %c0_21 = arith.constant 0 : index
      %c0_22 = arith.constant 0 : index
      %19 = vector.load %arg6[%c0_21, %c0_22] : memref<1x128xf32, #tpu.memory_space<vmem>>, vector<1x128xf32>
      %20 = vector.broadcast %19 : vector<1x128xf32> to vector<256x128xf32>
      %21 = arith.addf %18, %20 : vector<256x128xf32>
      %cst_23 = arith.constant 0.000000e+00 : f32
      %22 = vector.broadcast %cst_23 : f32 to vector<256x128xf32>
      %23 = arith.maximumf %21, %22 : vector<256x128xf32>
      %24 = arith.truncf %23 : vector<256x128xf32> to vector<256x128xbf16>
      %c0_24 = arith.constant 0 : index
      %c0_25 = arith.constant 0 : index
      %25 = vector.load %arg7[%c0_24, %c0_25] : memref<128x128xbf16, #tpu.memory_space<vmem>>, vector<128x128xbf16>
      %cst_26 = arith.constant dense<0.000000e+00> : vector<256x128xf32>
      %26 = tpu.matmul %24, %25, %cst_26 {dimension_numbers = #tpu.dot_dimension_numbers<[1], [0], [0], [1], [0, 0, 1, 1], [], []>} : vector<256x128xbf16>, vector<128x128xbf16>, vector<256x128xf32> -> vector<256x128xf32>
      %c0_27 = arith.constant 0 : index
      %c0_28 = arith.constant 0 : index
      %27 = vector.load %arg8[%c0_27, %c0_28] : memref<1x128xf32, #tpu.memory_space<vmem>>, vector<1x128xf32>
      %28 = vector.broadcast %27 : vector<1x128xf32> to vector<256x128xf32>
      %29 = arith.addf %26, %28 : vector<256x128xf32>
      %cst_29 = arith.constant 0.000000e+00 : f32
      %30 = vector.broadcast %cst_29 : f32 to vector<256x128xf32>
      %31 = arith.maximumf %29, %30 : vector<256x128xf32>
      %32 = arith.truncf %31 : vector<256x128xf32> to vector<256x128xbf16>
      %c0_30 = arith.constant 0 : index
      %c0_31 = arith.constant 0 : index
      %33 = vector.load %arg9[%c0_30, %c0_31] : memref<128x128xbf16, #tpu.memory_space<vmem>>, vector<128x128xbf16>
      %cst_32 = arith.constant dense<0.000000e+00> : vector<256x128xf32>
      %34 = tpu.matmul %32, %33, %cst_32 {dimension_numbers = #tpu.dot_dimension_numbers<[1], [0], [0], [1], [0, 0, 1, 1], [], []>} : vector<256x128xbf16>, vector<128x128xbf16>, vector<256x128xf32> -> vector<256x128xf32>
      %c0_33 = arith.constant 0 : index
      %c0_34 = arith.constant 0 : index
      %35 = vector.load %arg10[%c0_33, %c0_34] : memref<1x128xf32, #tpu.memory_space<vmem>>, vector<1x128xf32>
      %36 = vector.broadcast %35 : vector<1x128xf32> to vector<256x128xf32>
      %37 = arith.addf %34, %36 : vector<256x128xf32>
      %c0_35 = arith.constant 0 : index
      %c0_36 = arith.constant 0 : index
      %38 = vector.load %arg11[%c0_35, %c0_36] : memref<256x128xf32, #tpu.memory_space<vmem>>, vector<256x128xf32>
      tpu.vector_store %arg11[%c0_35, %c0_36], %37 {strides = array<i32>} : memref<256x128xf32, #tpu.memory_space<vmem>>, vector<256x128xf32>,
    } else {
    }
    return
  }
  func.func @transform_0(%arg0: i32, %arg1: i32) -> (i32, i32) {
    %c0_i32 = arith.constant 0 : i32
    return %arg0, %arg1 : i32, i32
  }
  func.func @transform_1(%arg0: i32, %arg1: i32) -> (i32, i32) {
    %c0_i32 = arith.constant 0 : i32
    return %arg0, %arg1 : i32, i32
  }
  func.func @transform_2(%arg0: i32, %arg1: i32) -> (i32, i32) {
    %c0_i32 = arith.constant 0 : i32
    %c0_i32_0 = arith.constant 0 : i32
    return %arg1, %c0_i32 : i32, i32
  }
  func.func @transform_3(%arg0: i32, %arg1: i32) -> (i32, i32) {
    %c0_i32 = arith.constant 0 : i32
    %c0_i32_0 = arith.constant 0 : i32
    return %arg1, %c0_i32 : i32, i32
  }
  func.func @transform_4(%arg0: i32, %arg1: i32) -> (i32, i32) {
    %c0_i32 = arith.constant 0 : i32
    %c0_i32_0 = arith.constant 0 : i32
    %c0_i32_1 = arith.constant 0 : i32
    return %c0_i32, %c0_i32_0 : i32, i32
  }
  func.func @transform_5(%arg0: i32, %arg1: i32) -> (i32, i32) {
    %c0_i32 = arith.constant 0 : i32
    %c0_i32_0 = arith.constant 0 : i32
    %c0_i32_1 = arith.constant 0 : i32
    return %c0_i32, %c0_i32_0 : i32, i32
  }
  func.func @transform_6(%arg0: i32, %arg1: i32) -> (i32, i32) {
    %c0_i32 = arith.constant 0 : i32
    %c0_i32_0 = arith.constant 0 : i32
    %c0_i32_1 = arith.constant 0 : i32
    return %c0_i32, %c0_i32_0 : i32, i32
  }
  func.func @transform_7(%arg0: i32, %arg1: i32) -> (i32, i32) {
    %c0_i32 = arith.constant 0 : i32
    %c0_i32_0 = arith.constant 0 : i32
    %c0_i32_1 = arith.constant 0 : i32
    return %c0_i32, %c0_i32_0 : i32, i32
  }
  func.func @transform_8(%arg0: i32, %arg1: i32) -> (i32, i32) {
    %c0_i32 = arith.constant 0 : i32
    %c0_i32_0 = arith.constant 0 : i32
    %c0_i32_1 = arith.constant 0 : i32
    return %c0_i32, %c0_i32_0 : i32, i32
  }
  func.func @transform_9(%arg0: i32, %arg1: i32) -> (i32, i32) {
    %c0_i32 = arith.constant 0 : i32
    %c0_i32_0 = arith.constant 0 : i32
    return %arg0, %c0_i32 : i32, i32
  }
}

</mosaic_0001>

<llo_original>
// kernel: squeeze.20
$region0: #{squeeze.20}
  %s0 = inlined_call_operand.vmem [shape: f32[392,4], index: 0, kind: input, shape index: {}]
  %s1 = inlined_call_operand.vmem [shape: f32[8,7,7,4], index: 1, kind: output, shape index: {}]
  $region1: #{squeeze.20} parent=0
    #allocation0 [shape = 'u8[16384]{0}', space=vmem, size = 0x4000, scoped, tag = 'scoped mem for input reshape']
    %s3 = sshllo.u32 0, 4
    %s4 = smul.addr 4, 3
    %s5 = scalar_lea.vmem %s0, %s4
    %v6 = vld [vmem:[%s5] sm:%s3]
    %s7 = scalar_lea.vmem [#allocation0], 24
    %8 = vst [vmem:[%s7] sm:%s3] %v6
    %s9 = smul.addr 4, 2
    %s10 = scalar_lea.vmem %s0, %s9
    %v11 = vld [vmem:[%s10] sm:%s3]
    %s12 = scalar_lea.vmem [#allocation0], 16
    %13 = vst [vmem:[%s12] sm:%s3] %v11
    %s14 = scalar_lea.vmem %s0, 4
    %v15 = vld [vmem:[%s14] sm:%s3]
    %s16 = scalar_lea.vmem [#allocation0], 8
    %17 = vst [vmem:[%s16] sm:%s3] %v15
    %v18 = vld [vmem:[%s0] sm:%s3]
    %19 = vst [vmem:[#allocation0] sm:%s3] %v18
    %v20 = vld [vmem:[#allocation0] sm:$0xf]
    %vm21 = vcmask 56320
    %22 = vst.msk [vmem:[%s1] sm:$0x1] %vm21, %v20
    %s23 = scalar_lea.vmem %s1, 63
    %24 = vst.msk [vmem:[%s23] sm:$0x2] %vm21, %v20
    %s25 = scalar_lea.vmem %s1, 126
    %26 = vst.msk [vmem:[%s25] sm:$0x4] %vm21, %v20
    %s27 = scalar_lea.vmem %s1, 189
    %28 = vst.msk [vmem:[%s27] sm:$0x8] %vm21, %v20
    %s29 = scalar_lea.vmem [#allocation0], 24
    %v30 = vld [vmem:[%s29] sm:$0xf]
    %31 = vrot.lane.b32.xlu0 %v30, 127
    %v32 = vpop.permute.xlu0 %31
    %vm33 = vcmask 56320
    %s34 = scalar_lea.vmem %s1, 62
    %35 = vst.msk [vmem:[%s34] sm:$0x1] %vm33, %v32
    %s36 = scalar_lea.vmem %s1, 125
    %37 = vst.msk [vmem:[%s36] sm:$0x2] %vm33, %v32
    %s38 = scalar_lea.vmem %s1, 188
    %39 = vst.msk [vmem:[%s38] sm:$0x4] %vm33, %v32
    %s40 = scalar_lea.vmem %s1, 251
    %41 = vst.msk [vmem:[%s40] sm:$0x8] %vm33, %v32
    %s42 = scalar_lea.vmem [#allocation0], 16
    %v43 = vld [vmem:[%s42] sm:$0xf]
    %44 = vrot.lane.b32.xlu0 %v43, 125
    %v45 = vpop.permute.xlu0 %44
    %vm46 = vcmask 56320
    %s47 = scalar_lea.vmem %s1, 42
    %48 = vst.msk [vmem:[%s47] sm:$0x1] %vm46, %v45
    %s49 = scalar_lea.vmem %s1, 105
    %50 = vst.msk [vmem:[%s49] sm:$0x2] %vm46, %v45
    %s51 = scalar_lea.vmem %s1, 168
    %52 = vst.msk [vmem:[%s51] sm:$0x4] %vm46, %v45
    %s53 = scalar_lea.vmem %s1, 231
    %54 = vst.msk [vmem:[%s53] sm:$0x8] %vm46, %v45
    %s55 = scalar_lea.vmem [#allocation0], 8
    %v56 = vld [vmem:[%s55] sm:$0xf]
    %57 = vrot.lane.b32.xlu0 %v56, 123
    %v58 = vpop.permute.xlu0 %57
    %vm59 = vcmask 56320
    %s60 = scalar_lea.vmem %s1, 21
    %61 = vst.msk [vmem:[%s60] sm:$0x1] %vm59, %v58
    %s62 = scalar_lea.vmem %s1, 84
    %63 = vst.msk [vmem:[%s62] sm:$0x2] %vm59, %v58
    %s64 = scalar_lea.vmem %s1, 147
    %65 = vst.msk [vmem:[%s64] sm:$0x4] %vm59, %v58
    %s66 = scalar_lea.vmem %s1, 210
    %67 = vst.msk [vmem:[%s66] sm:$0x8] %vm59, %v58
    %v68 = vld [vmem:[#allocation0] sm:$0xf]
    %69 = vrot.lane.b32.xlu0 %v68, 121
    %v70 = vpop.permute.xlu0 %69
    %vm71 = vcmask 56320
    %s72 = scalar_lea.vmem %s1, 1
    %73 = vst.msk [vmem:[%s72] sm:$0x1] %vm71, %v70
    %s74 = scalar_lea.vmem %s1, 64
    %75 = vst.msk [vmem:[%s74] sm:$0x2] %vm71, %v70
    %s76 = scalar_lea.vmem %s1, 127
    %77 = vst.msk [vmem:[%s76] sm:$0x4] %vm71, %v70
    %s78 = scalar_lea.vmem %s1, 190
    %79 = vst.msk [vmem:[%s78] sm:$0x8] %vm71, %v70
    %s80 = scalar_lea.vmem [#allocation0], 16
    %v81 = vld [vmem:[%s80] sm:$0xf]
    %82 = vrot.lane.b32.xlu0 %v81, 118
    %v83 = vpop.permute.xlu0 %82
    %vm84 = vcmask 56320
    %s85 = scalar_lea.vmem %s1, 43
    %86 = vst.msk [vmem:[%s85] sm:$0x1] %vm84, %v83
    %s87 = scalar_lea.vmem %s1, 106
    %88 = vst.msk [vmem:[%s87] sm:$0x2] %vm84, %v83
    %s89 = scalar_lea.vmem %s1, 169
    %90 = vst.msk [vmem:[%s89] sm:$0x4] %vm84, %v83
    %s91 = scalar_lea.vmem %s1, 232
    %92 = vst.msk [vmem:[%s91] sm:$0x8] %vm84, %v83
    %s93 = scalar_lea.vmem [#allocation0], 8
    %v94 = vld [vmem:[%s93] sm:$0xf]
    %95 = vrot.lane.b32.xlu0 %v94, 116
    %v96 = vpop.permute.xlu0 %95
    %vm97 = vcmask 56320
    %s98 = scalar_lea.vmem %s1, 22
    %99 = vst.msk [vmem:[%s98] sm:$0x1] %vm97, %v96
    %s100 = scalar_lea.vmem %s1, 85
    %101 = vst.msk [vmem:[%s100] sm:$0x2] %vm97, %v96
    %s102 = scalar_lea.vmem %s1, 148
    %103 = vst.msk [vmem:[%s102] sm:$0x4] %vm97, %v96
    %s104 = scalar_lea.vmem %s1, 211
    %105 = vst.msk [vmem:[%s104] sm:$0x8] %vm97, %v96
    %v106 = vld [vmem:[#allocation0] sm:$0xf]
    %107 = vrot.lane.b32.xlu0 %v106, 114
    %v108 = vpop.permute.xlu0 %107
    %vm109 = vcmask 56320
    %s110 = scalar_lea.vmem %s1, 2
    %111 = vst.msk [vmem:[%s110] sm:$0x1] %vm109, %v108
    %s112 = scalar_lea.vmem %s1, 65
    %113 = vst.msk [vmem:[%s112] sm:$0x2] %vm109, %v108
    %s114 = scalar_lea.vmem %s1, 128
    %115 = vst.msk [vmem:[%s114] sm:$0x4] %vm109, %v108
    %s116 = scalar_lea.vmem %s1, 191
    %117 = vst.msk [vmem:[%s116] sm:$0x8] %vm109, %v108
    %s118 = scalar_lea.vmem [#allocation0], 16
    %v119 = vld [vmem:[%s118] sm:$0xf]
    %120 = vrot.lane.b32.xlu0 %v119, 111
    %v121 = vpop.permute.xlu0 %120
    %vm122 = vcmask 56320
    %s123 = scalar_lea.vmem %s1, 44
    %124 = vst.msk [vmem:[%s123] sm:$0x1] %vm122, %v121
    %s125 = scalar_lea.vmem %s1, 107
    %126 = vst.msk [vmem:[%s125] sm:$0x2] %vm122, %v121
    %s127 = scalar_lea.vmem %s1, 170
    %128 = vst.msk [vmem:[%s127] sm:$0x4] %vm122, %v121
    %s129 = scalar_lea.vmem %s1, 233
    %130 = vst.msk [vmem:[%s129] sm:$0x8] %vm122, %v121
    %s131 = scalar_lea.vmem [#allocation0], 8
    %v132 = vld [vmem:[%s131] sm:$0xf]
    %133 = vrot.lane.b32.xlu0 %v132, 109
    %v134 = vpop.permute.xlu0 %133
    %vm135 = vcmask 56320
    %s136 = scalar_lea.vmem %s1, 24
    %137 = vst.msk [vmem:[%s136] sm:$0x1] %vm135, %v134
    %s138 = scalar_lea.vmem %s1, 87
    %139 = vst.msk [vmem:[%s138] sm:$0x2] %vm135, %v134
    %s140 = scalar_lea.vmem %s1, 150
    %141 = vst.msk [vmem:[%s140] sm:$0x4] %vm135, %v134
    %s142 = scalar_lea.vmem %s1, 213
    %143 = vst.msk [vmem:[%s142] sm:$0x8] %vm135, %v134
    %v144 = vld [vmem:[#allocation0] sm:$0xf]
    %145 = vrot.lane.b32.xlu0 %v144, 107
    %v146 = vpop.permute.xlu0 %145
    %vm147 = vcmask 56320
    %s148 = scalar_lea.vmem %s1, 3
    %149 = vst.msk [vmem:[%s148] sm:$0x1] %vm147, %v146
    %s150 = scalar_lea.vmem %s1, 66
    %151 = vst.msk [vmem:[%s150] sm:$0x2] %vm147, %v146
    %s152 = scalar_lea.vmem %s1, 129
    %153 = vst.msk [vmem:[%s152] sm:$0x4] %vm147, %v146
    %s154 = scalar_lea.vmem %s1, 192
    %155 = vst.msk [vmem:[%s154] sm:$0x8] %vm147, %v146
    %s156 = scalar_lea.vmem [#allocation0], 16
    %v157 = vld [vmem:[%s156] sm:$0xf]
    %158 = vrot.lane.b32.xlu0 %v157, 104
    %v159 = vpop.permute.xlu0 %158
    %vm160 = vcmask 56320
    %s161 = scalar_lea.vmem %s1, 45
    %162 = vst.msk [vmem:[%s161] sm:$0x1] %vm160, %v159
    %s163 = scalar_lea.vmem %s1, 108
    %164 = vst.msk [vmem:[%s163] sm:$0x2] %vm160, %v159
    %s165 = scalar_lea.vmem %s1, 171
    %166 = vst.msk [vmem:[%s165] sm:$0x4] %vm160, %v159
    %s167 = scalar_lea.vmem %s1, 234
    %168 = vst.msk [vmem:[%s167] sm:$0x8] %vm160, %v159
    %s169 = scalar_lea.vmem [#allocation0], 8
    %v170 = vld [vmem:[%s169] sm:$0xf]
    %171 = vrot.lane.b32.xlu0 %v170, 102
    %v172 = vpop.permute.xlu0 %171
    %vm173 = vcmask 56320
    %s174 = scalar_lea.vmem %s1, 25
    %175 = vst.msk [vmem:[%s174] sm:$0x1] %vm173, %v172
    %s176 = scalar_lea.vmem %s1, 88
    %177 = vst.msk [vmem:[%s176] sm:$0x2] %vm173, %v172
    %s178 = scalar_lea.vmem %s1, 151
    %179 = vst.msk [vmem:[%s178] sm:$0x4] %vm173, %v172
    %s180 = scalar_lea.vmem %s1, 214
    %181 = vst.msk [vmem:[%s180] sm:$0x8] %vm173, %v172
    %v182 = vld [vmem:[#allocation0] sm:$0xf]
    %183 = vrot.lane.b32.xlu0 %v182, 100
    %v184 = vpop.permute.xlu0 %183
    %vm185 = vcmask 56320
    %s186 = scalar_lea.vmem %s1, 4
    %187 = vst.msk [vmem:[%s186] sm:$0x1] %vm185, %v184
    %s188 = scalar_lea.vmem %s1, 67
    %189 = vst.msk [vmem:[%s188] sm:$0x2] %vm185, %v184
    %s190 = scalar_lea.vmem %s1, 130
    %191 = vst.msk [vmem:[%s190] sm:$0x4] %vm185, %v184
    %s192 = scalar_lea.vmem %s1, 193
    %193 = vst.msk [vmem:[%s192] sm:$0x8] %vm185, %v184
    %s194 = scalar_lea.vmem [#allocation0], 16
    %v195 = vld [vmem:[%s194] sm:$0xf]
    %196 = vrot.lane.b32.xlu0 %v195, 97
    %v197 = vpop.permute.xlu0 %196
    %vm198 = vcmask 56320
    %s199 = scalar_lea.vmem %s1, 46
    %200 = vst.msk [vmem:[%s199] sm:$0x1] %vm198, %v197
    %s201 = scalar_lea.vmem %s1, 109
    %202 = vst.msk [vmem:[%s201] sm:$0x2] %vm198, %v197
    %s203 = scalar_lea.vmem %s1, 172
    %204 = vst.msk [vmem:[%s203] sm:$0x4] %vm198, %v197
    %s205 = scalar_lea.vmem %s1, 235
    %206 = vst.msk [vmem:[%s205] sm:$0x8] %vm198, %v197
    %s207 = scalar_lea.vmem [#allocation0], 8
    %v208 = vld [vmem:[%s207] sm:$0xf]
    %209 = vrot.lane.b32.xlu0 %v208, 95
    %v210 = vpop.permute.xlu0 %209
    %vm211 = vcmask 56320
    %s212 = scalar_lea.vmem %s1, 26
    %213 = vst.msk [vmem:[%s212] sm:$0x1] %vm211, %v210
    %s214 = scalar_lea.vmem %s1, 89
    %215 = vst.msk [vmem:[%s214] sm:$0x2] %vm211, %v210
    %s216 = scalar_lea.vmem %s1, 152
    %217 = vst.msk [vmem:[%s216] sm:$0x4] %vm211, %v210
    %s218 = scalar_lea.vmem %s1, 215
    %219 = vst.msk [vmem:[%s218] sm:$0x8] %vm211, %v210
    %v220 = vld [vmem:[#allocation0] sm:$0xf]
    %221 = vrot.lane.b32.xlu0 %v220, 93
    %v222 = vpop.permute.xlu0 %221
    %vm223 = vcmask 56320
    %s224 = scalar_lea.vmem %s1, 5
    %225 = vst.msk [vmem:[%s224] sm:$0x1] %vm223, %v222
    %s226 = scalar_lea.vmem %s1, 68
    %227 = vst.msk [vmem:[%s226] sm:$0x2] %vm223, %v222
    %s228 = scalar_lea.vmem %s1, 131
    %229 = vst.msk [vmem:[%s228] sm:$0x4] %vm223, %v222
    %s230 = scalar_lea.vmem %s1, 194
    %231 = vst.msk [vmem:[%s230] sm:$0x8] %vm223, %v222
    %s232 = scalar_lea.vmem [#allocation0], 16
    %v233 = vld [vmem:[%s232] sm:$0xf]
    %234 = vrot.lane.b32.xlu0 %v233, 90
    %v235 = vpop.permute.xlu0 %234
    %vm236 = vcmask 56320
    %s237 = scalar_lea.vmem %s1, 48
    %238 = vst.msk [vmem:[%s237] sm:$0x1] %vm236, %v235
    %s239 = scalar_lea.vmem %s1, 111
    %240 = vst.msk [vmem:[%s239] sm:$0x2] %vm236, %v235
    %s241 = scalar_lea.vmem %s1, 174
    %242 = vst.msk [vmem:[%s241] sm:$0x4] %vm236, %v235
    %s243 = scalar_lea.vmem %s1, 237
    %244 = vst.msk [vmem:[%s243] sm:$0x8] %vm236, %v235
    %s245 = scalar_lea.vmem [#allocation0], 8
    %v246 = vld [vmem:[%s245] sm:$0xf]
    %247 = vrot.lane.b32.xlu0 %v246, 88
    %v248 = vpop.permute.xlu0 %247
    %vm249 = vcmask 56320
    %s250 = scalar_lea.vmem %s1, 27
    %251 = vst.msk [vmem:[%s250] sm:$0x1] %vm249, %v248
    %s252 = scalar_lea.vmem %s1, 90
    %253 = vst.msk [vmem:[%s252] sm:$0x2] %vm249, %v248
    %s254 = scalar_lea.vmem %s1, 153
    %255 = vst.msk [vmem:[%s254] sm:$0x4] %vm249, %v248
    %s256 = scalar_lea.vmem %s1, 216
    %257 = vst.msk [vmem:[%s256] sm:$0x8] %vm249, %v248
    %v258 = vld [vmem:[#allocation0] sm:$0xf]
    %259 = vrot.lane.b32.xlu0 %v258, 86
    %v260 = vpop.permute.xlu0 %259
    %vm261 = vcmask 56320
    %s262 = scalar_lea.vmem %s1, 6
    %263 = vst.msk [vmem:[%s262] sm:$0x1] %vm261, %v260
    %s264 = scalar_lea.vmem %s1, 69
    %265 = vst.msk [vmem:[%s264] sm:$0x2] %vm261, %v260
    %s266 = scalar_lea.vmem %s1, 132
    %267 = vst.msk [vmem:[%s266] sm:$0x4] %vm261, %v260
    %s268 = scalar_lea.vmem %s1, 195
    %269 = vst.msk [vmem:[%s268] sm:$0x8] %vm261, %v260
    %s270 = scalar_lea.vmem [#allocation0], 16
    %v271 = vld [vmem:[%s270] sm:$0xf]
    %272 = vrot.lane.b32.xlu0 %v271, 83
    %v273 = vpop.permute.xlu0 %272
    %vm274 = vcmask 56320
    %s275 = scalar_lea.vmem %s1, 49
    %276 = vst.msk [vmem:[%s275] sm:$0x1] %vm274, %v273
    %s277 = scalar_lea.vmem %s1, 112
    %278 = vst.msk [vmem:[%s277] sm:$0x2] %vm274, %v273
    %s279 = scalar_lea.vmem %s1, 175
    %280 = vst.msk [vmem:[%s279] sm:$0x4] %vm274, %v273
    %s281 = scalar_lea.vmem %s1, 238
    %282 = vst.msk [vmem:[%s281] sm:$0x8] %vm274, %v273
    %s283 = scalar_lea.vmem [#allocation0], 8
    %v284 = vld [vmem:[%s283] sm:$0xf]
    %285 = vrot.lane.b32.xlu0 %v284, 81
    %v286 = vpop.permute.xlu0 %285
    %vm287 = vcmask 56320
    %s288 = scalar_lea.vmem %s1, 28
    %289 = vst.msk [vmem:[%s288] sm:$0x1] %vm287, %v286
    %s290 = scalar_lea.vmem %s1, 91
    %291 = vst.msk [vmem:[%s290] sm:$0x2] %vm287, %v286
    %s292 = scalar_lea.vmem %s1, 154
    %293 = vst.msk [vmem:[%s292] sm:$0x4] %vm287, %v286
    %s294 = scalar_lea.vmem %s1, 217
    %295 = vst.msk [vmem:[%s294] sm:$0x8] %vm287, %v286
    %v296 = vld [vmem:[#allocation0] sm:$0xf]
    %297 = vrot.lane.b32.xlu0 %v296, 79
    %v298 = vpop.permute.xlu0 %297
    %vm299 = vcmask 56320
    %s300 = scalar_lea.vmem %s1, 8
    %301 = vst.msk [vmem:[%s300] sm:$0x1] %vm299, %v298
    %s302 = scalar_lea.vmem %s1, 71
    %303 = vst.msk [vmem:[%s302] sm:$0x2] %vm299, %v298
    %s304 = scalar_lea.vmem %s1, 134
    %305 = vst.msk [vmem:[%s304] sm:$0x4] %vm299, %v298
    %s306 = scalar_lea.vmem %s1, 197
    %307 = vst.msk [vmem:[%s306] sm:$0x8] %vm299, %v298
    %s308 = scalar_lea.vmem [#allocation0], 16
    %v309 = vld [vmem:[%s308] sm:$0xf]
    %310 = vrot.lane.b32.xlu0 %v309, 76
    %v311 = vpop.permute.xlu0 %310
    %vm312 = vcmask 56320
    %s313 = scalar_lea.vmem %s1, 50
    %314 = vst.msk [vmem:[%s313] sm:$0x1] %vm312, %v311
    %s315 = scalar_lea.vmem %s1, 113
    %316 = vst.msk [vmem:[%s315] sm:$0x2] %vm312, %v311
    %s317 = scalar_lea.vmem %s1, 176
    %318 = vst.msk [vmem:[%s317] sm:$0x4] %vm312, %v311
    %s319 = scalar_lea.vmem %s1, 239
    %320 = vst.msk [vmem:[%s319] sm:$0x8] %vm312, %v311
    %s321 = scalar_lea.vmem [#allocation0], 8
    %v322 = vld [vmem:[%s321] sm:$0xf]
    %323 = vrot.lane.b32.xlu0 %v322, 74
    %v324 = vpop.permute.xlu0 %323
    %vm325 = vcmask 56320
    %s326 = scalar_lea.vmem %s1, 29
    %327 = vst.msk [vmem:[%s326] sm:$0x1] %vm325, %v324
    %s328 = scalar_lea.vmem %s1, 92
    %329 = vst.msk [vmem:[%s328] sm:$0x2] %vm325, %v324
    %s330 = scalar_lea.vmem %s1, 155
    %331 = vst.msk [vmem:[%s330] sm:$0x4] %vm325, %v324
    %s332 = scalar_lea.vmem %s1, 218
    %333 = vst.msk [vmem:[%s332] sm:$0x8] %vm325, %v324
    %v334 = vld [vmem:[#allocation0] sm:$0xf]
    %335 = vrot.lane.b32.xlu0 %v334, 72
    %v336 = vpop.permute.xlu0 %335
    %vm337 = vcmask 56320
    %s338 = scalar_lea.vmem %s1, 9
    %339 = vst.msk [vmem:[%s338] sm:$0x1] %vm337, %v336
    %s340 = scalar_lea.vmem %s1, 72
    %341 = vst.msk [vmem:[%s340] sm:$0x2] %vm337, %v336
    %s342 = scalar_lea.vmem %s1, 135
    %343 = vst.msk [vmem:[%s342] sm:$0x4] %vm337, %v336
    %s344 = scalar_lea.vmem %s1, 198
    %345 = vst.msk [vmem:[%s344] sm:$0x8] %vm337, %v336
    %s346 = scalar_lea.vmem [#allocation0], 16
    %v347 = vld [vmem:[%s346] sm:$0xf]
    %348 = vrot.lane.b32.xlu0 %v347, 69
    %v349 = vpop.permute.xlu0 %348
    %vm350 = vcmask 56320
    %s351 = scalar_lea.vmem %s1, 51
    %352 = vst.msk [vmem:[%s351] sm:$0x1] %vm350, %v349
    %s353 = scalar_lea.vmem %s1, 114
    %354 = vst.msk [vmem:[%s353] sm:$0x2] %vm350, %v349
    %s355 = scalar_lea.vmem %s1, 177
    %356 = vst.msk [vmem:[%s355] sm:$0x4] %vm350, %v349
    %s357 = scalar_lea.vmem %s1, 240
    %358 = vst.msk [vmem:[%s357] sm:$0x8] %vm350, %v349
    %s359 = scalar_lea.vmem [#allocation0], 8
    %v360 = vld [vmem:[%s359] sm:$0xf]
    %361 = vrot.lane.b32.xlu0 %v360, 67
    %v362 = vpop.permute.xlu0 %361
    %vm363 = vcmask 56320
    %s364 = scalar_lea.vmem %s1, 30
    %365 = vst.msk [vmem:[%s364] sm:$0x1] %vm363, %v362
    %s366 = scalar_lea.vmem %s1, 93
    %367 = vst.msk [vmem:[%s366] sm:$0x2] %vm363, %v362
    %s368 = scalar_lea.vmem %s1, 156
    %369 = vst.msk [vmem:[%s368] sm:$0x4] %vm363, %v362
    %s370 = scalar_lea.vmem %s1, 219
    %371 = vst.msk [vmem:[%s370] sm:$0x8] %vm363, %v362
    %v372 = vld [vmem:[#allocation0] sm:$0xf]
    %373 = vrot.lane.b32.xlu0 %v372, 65
    %v374 = vpop.permute.xlu0 %373
    %vm375 = vcmask 56320
    %s376 = scalar_lea.vmem %s1, 10
    %377 = vst.msk [vmem:[%s376] sm:$0x1] %vm375, %v374
    %s378 = scalar_lea.vmem %s1, 73
    %379 = vst.msk [vmem:[%s378] sm:$0x2] %vm375, %v374
    %s380 = scalar_lea.vmem %s1, 136
    %381 = vst.msk [vmem:[%s380] sm:$0x4] %vm375, %v374
    %s382 = scalar_lea.vmem %s1, 199
    %383 = vst.msk [vmem:[%s382] sm:$0x8] %vm375, %v374
    %s384 = scalar_lea.vmem [#allocation0], 16
    %v385 = vld [vmem:[%s384] sm:$0xf]
    %386 = vrot.lane.b32.xlu0 %v385, 62
    %v387 = vpop.permute.xlu0 %386
    %vm388 = vcmask 56320
    %s389 = scalar_lea.vmem %s1, 52
    %390 = vst.msk [vmem:[%s389] sm:$0x1] %vm388, %v387
    %s391 = scalar_lea.vmem %s1, 115
    %392 = vst.msk [vmem:[%s391] sm:$0x2] %vm388, %v387
    %s393 = scalar_lea.vmem %s1, 178
    %394 = vst.msk [vmem:[%s393] sm:$0x4] %vm388, %v387
    %s395 = scalar_lea.vmem %s1, 241
    %396 = vst.msk [vmem:[%s395] sm:$0x8] %vm388, %v387
    %s397 = scalar_lea.vmem [#allocation0], 8
    %v398 = vld [vmem:[%s397] sm:$0xf]
    %399 = vrot.lane.b32.xlu0 %v398, 60
    %v400 = vpop.permute.xlu0 %399
    %vm401 = vcmask 56320
    %s402 = scalar_lea.vmem %s1, 32
    %403 = vst.msk [vmem:[%s402] sm:$0x1] %vm401, %v400
    %s404 = scalar_lea.vmem %s1, 95
    %405 = vst.msk [vmem:[%s404] sm:$0x2] %vm401, %v400
    %s406 = scalar_lea.vmem %s1, 158
    %407 = vst.msk [vmem:[%s406] sm:$0x4] %vm401, %v400
    %s408 = scalar_lea.vmem %s1, 221
    %409 = vst.msk [vmem:[%s408] sm:$0x8] %vm401, %v400
    %v410 = vld [vmem:[#allocation0] sm:$0xf]
    %411 = vrot.lane.b32.xlu0 %v410, 58
    %v412 = vpop.permute.xlu0 %411
    %vm413 = vcmask 56320
    %s414 = scalar_lea.vmem %s1, 11
    %415 = vst.msk [vmem:[%s414] sm:$0x1] %vm413, %v412
    %s416 = scalar_lea.vmem %s1, 74
    %417 = vst.msk [vmem:[%s416] sm:$0x2] %vm413, %v412
    %s418 = scalar_lea.vmem %s1, 137
    %419 = vst.msk [vmem:[%s418] sm:$0x4] %vm413, %v412
    %s420 = scalar_lea.vmem %s1, 200
    %421 = vst.msk [vmem:[%s420] sm:$0x8] %vm413, %v412
    %s422 = scalar_lea.vmem [#allocation0], 16
    %v423 = vld [vmem:[%s422] sm:$0xf]
    %424 = vrot.lane.b32.xlu0 %v423, 55
    %v425 = vpop.permute.xlu0 %424
    %vm426 = vcmask 56320
    %s427 = scalar_lea.vmem %s1, 53
    %428 = vst.msk [vmem:[%s427] sm:$0x1] %vm426, %v425
    %s429 = scalar_lea.vmem %s1, 116
    %430 = vst.msk [vmem:[%s429] sm:$0x2] %vm426, %v425
    %s431 = scalar_lea.vmem %s1, 179
    %432 = vst.msk [vmem:[%s431] sm:$0x4] %vm426, %v425
    %s433 = scalar_lea.vmem %s1, 242
    %434 = vst.msk [vmem:[%s433] sm:$0x8] %vm426, %v425
    %s435 = scalar_lea.vmem [#allocation0], 8
    %v436 = vld [vmem:[%s435] sm:$0xf]
    %437 = vrot.lane.b32.xlu0 %v436, 53
    %v438 = vpop.permute.xlu0 %437
    %vm439 = vcmask 56320
    %s440 = scalar_lea.vmem %s1, 33
    %441 = vst.msk [vmem:[%s440] sm:$0x1] %vm439, %v438
    %s442 = scalar_lea.vmem %s1, 96
    %443 = vst.msk [vmem:[%s442] sm:$0x2] %vm439, %v438
    %s444 = scalar_lea.vmem %s1, 159
    %445 = vst.msk [vmem:[%s444] sm:$0x4] %vm439, %v438
    %s446 = scalar_lea.vmem %s1, 222
    %447 = vst.msk [vmem:[%s446] sm:$0x8] %vm439, %v438
    %v448 = vld [vmem:[#allocation0] sm:$0xf]
    %449 = vrot.lane.b32.xlu0 %v448, 51
    %v450 = vpop.permute.xlu0 %449
    %vm451 = vcmask 56320
    %s452 = scalar_lea.vmem %s1, 12
    %453 = vst.msk [vmem:[%s452] sm:$0x1] %vm451, %v450
    %s454 = scalar_lea.vmem %s1, 75
    %455 = vst.msk [vmem:[%s454] sm:$0x2] %vm451, %v450
    %s456 = scalar_lea.vmem %s1, 138
    %457 = vst.msk [vmem:[%s456] sm:$0x4] %vm451, %v450
    %s458 = scalar_lea.vmem %s1, 201
    %459 = vst.msk [vmem:[%s458] sm:$0x8] %vm451, %v450
    %s460 = scalar_lea.vmem [#allocation0], 16
    %v461 = vld [vmem:[%s460] sm:$0xf]
    %462 = vrot.lane.b32.xlu0 %v461, 48
    %v463 = vpop.permute.xlu0 %462
    %vm464 = vcmask 56320
    %s465 = scalar_lea.vmem %s1, 54
    %466 = vst.msk [vmem:[%s465] sm:$0x1] %vm464, %v463
    %s467 = scalar_lea.vmem %s1, 117
    %468 = vst.msk [vmem:[%s467] sm:$0x2] %vm464, %v463
    %s469 = scalar_lea.vmem %s1, 180
    %470 = vst.msk [vmem:[%s469] sm:$0x4] %vm464, %v463
    %s471 = scalar_lea.vmem %s1, 243
    %472 = vst.msk [vmem:[%s471] sm:$0x8] %vm464, %v463
    %s473 = scalar_lea.vmem [#allocation0], 8
    %v474 = vld [vmem:[%s473] sm:$0xf]
    %475 = vrot.lane.b32.xlu0 %v474, 46
    %v476 = vpop.permute.xlu0 %475
    %vm477 = vcmask 56320
    %s478 = scalar_lea.vmem %s1, 34
    %479 = vst.msk [vmem:[%s478] sm:$0x1] %vm477, %v476
    %s480 = scalar_lea.vmem %s1, 97
    %481 = vst.msk [vmem:[%s480] sm:$0x2] %vm477, %v476
    %s482 = scalar_lea.vmem %s1, 160
    %483 = vst.msk [vmem:[%s482] sm:$0x4] %vm477, %v476
    %s484 = scalar_lea.vmem %s1, 223
    %485 = vst.msk [vmem:[%s484] sm:$0x8] %vm477, %v476
    %v486 = vld [vmem:[#allocation0] sm:$0xf]
    %487 = vrot.lane.b32.xlu0 %v486, 44
    %v488 = vpop.permute.xlu0 %487
    %vm489 = vcmask 56320
    %s490 = scalar_lea.vmem %s1, 13
    %491 = vst.msk [vmem:[%s490] sm:$0x1] %vm489, %v488
    %s492 = scalar_lea.vmem %s1, 76
    %493 = vst.msk [vmem:[%s492] sm:$0x2] %vm489, %v488
    %s494 = scalar_lea.vmem %s1, 139
    %495 = vst.msk [vmem:[%s494] sm:$0x4] %vm489, %v488
    %s496 = scalar_lea.vmem %s1, 202
    %497 = vst.msk [vmem:[%s496] sm:$0x8] %vm489, %v488
    %s498 = scalar_lea.vmem [#allocation0], 16
    %v499 = vld [vmem:[%s498] sm:$0xf]
    %500 = vrot.lane.b32.xlu0 %v499, 41
    %v501 = vpop.permute.xlu0 %500
    %vm502 = vcmask 56320
    %s503 = scalar_lea.vmem %s1, 56
    %504 = vst.msk [vmem:[%s503] sm:$0x1] %vm502, %v501
    %s505 = scalar_lea.vmem %s1, 119
    %506 = vst.msk [vmem:[%s505] sm:$0x2] %vm502, %v501
    %s507 = scalar_lea.vmem %s1, 182
    %508 = vst.msk [vmem:[%s507] sm:$0x4] %vm502, %v501
    %s509 = scalar_lea.vmem %s1, 245
    %510 = vst.msk [vmem:[%s509] sm:$0x8] %vm502, %v501
    %s511 = scalar_lea.vmem [#allocation0], 8
    %v512 = vld [vmem:[%s511] sm:$0xf]
    %513 = vrot.lane.b32.xlu0 %v512, 39
    %v514 = vpop.permute.xlu0 %513
    %vm515 = vcmask 56320
    %s516 = scalar_lea.vmem %s1, 35
    %517 = vst.msk [vmem:[%s516] sm:$0x1] %vm515, %v514
    %s518 = scalar_lea.vmem %s1, 98
    %519 = vst.msk [vmem:[%s518] sm:$0x2] %vm515, %v514
    %s520 = scalar_lea.vmem %s1, 161
    %521 = vst.msk [vmem:[%s520] sm:$0x4] %vm515, %v514
    %s522 = scalar_lea.vmem %s1, 224
    %523 = vst.msk [vmem:[%s522] sm:$0x8] %vm515, %v514
    %v524 = vld [vmem:[#allocation0] sm:$0xf]
    %525 = vrot.lane.b32.xlu0 %v524, 37
    %v526 = vpop.permute.xlu0 %525
    %vm527 = vcmask 56320
    %s528 = scalar_lea.vmem %s1, 14
    %529 = vst.msk [vmem:[%s528] sm:$0x1] %vm527, %v526
    %s530 = scalar_lea.vmem %s1, 77
    %531 = vst.msk [vmem:[%s530] sm:$0x2] %vm527, %v526
    %s532 = scalar_lea.vmem %s1, 140
    %533 = vst.msk [vmem:[%s532] sm:$0x4] %vm527, %v526
    %s534 = scalar_lea.vmem %s1, 203
    %535 = vst.msk [vmem:[%s534] sm:$0x8] %vm527, %v526
    %s536 = scalar_lea.vmem [#allocation0], 16
    %v537 = vld [vmem:[%s536] sm:$0xf]
    %538 = vrot.lane.b32.xlu0 %v537, 34
    %v539 = vpop.permute.xlu0 %538
    %vm540 = vcmask 56320
    %s541 = scalar_lea.vmem %s1, 57
    %542 = vst.msk [vmem:[%s541] sm:$0x1] %vm540, %v539
    %s543 = scalar_lea.vmem %s1, 120
    %544 = vst.msk [vmem:[%s543] sm:$0x2] %vm540, %v539
    %s545 = scalar_lea.vmem %s1, 183
    %546 = vst.msk [vmem:[%s545] sm:$0x4] %vm540, %v539
    %s547 = scalar_lea.vmem %s1, 246
    %548 = vst.msk [vmem:[%s547] sm:$0x8] %vm540, %v539
    %s549 = scalar_lea.vmem [#allocation0], 8
    %v550 = vld [vmem:[%s549] sm:$0xf]
    %551 = vrot.lane.b32.xlu0 %v550, 32
    %v552 = vpop.permute.xlu0 %551
    %vm553 = vcmask 56320
    %s554 = scalar_lea.vmem %s1, 36
    %555 = vst.msk [vmem:[%s554] sm:$0x1] %vm553, %v552
    %s556 = scalar_lea.vmem %s1, 99
    %557 = vst.msk [vmem:[%s556] sm:$0x2] %vm553, %v552
    %s558 = scalar_lea.vmem %s1, 162
    %559 = vst.msk [vmem:[%s558] sm:$0x4] %vm553, %v552
    %s560 = scalar_lea.vmem %s1, 225
    %561 = vst.msk [vmem:[%s560] sm:$0x8] %vm553, %v552
    %v562 = vld [vmem:[#allocation0] sm:$0xf]
    %563 = vrot.lane.b32.xlu0 %v562, 30
    %v564 = vpop.permute.xlu0 %563
    %vm565 = vcmask 56320
    %s566 = scalar_lea.vmem %s1, 16
    %567 = vst.msk [vmem:[%s566] sm:$0x1] %vm565, %v564
    %s568 = scalar_lea.vmem %s1, 79
    %569 = vst.msk [vmem:[%s568] sm:$0x2] %vm565, %v564
    %s570 = scalar_lea.vmem %s1, 142
    %571 = vst.msk [vmem:[%s570] sm:$0x4] %vm565, %v564
    %s572 = scalar_lea.vmem %s1, 205
    %573 = vst.msk [vmem:[%s572] sm:$0x8] %vm565, %v564
    %s574 = scalar_lea.vmem [#allocation0], 16
    %v575 = vld [vmem:[%s574] sm:$0xf]
    %576 = vrot.lane.b32.xlu0 %v575, 27
    %v577 = vpop.permute.xlu0 %576
    %vm578 = vcmask 56320
    %s579 = scalar_lea.vmem %s1, 58
    %580 = vst.msk [vmem:[%s579] sm:$0x1] %vm578, %v577
    %s581 = scalar_lea.vmem %s1, 121
    %582 = vst.msk [vmem:[%s581] sm:$0x2] %vm578, %v577
    %s583 = scalar_lea.vmem %s1, 184
    %584 = vst.msk [vmem:[%s583] sm:$0x4] %vm578, %v577
    %s585 = scalar_lea.vmem %s1, 247
    %586 = vst.msk [vmem:[%s585] sm:$0x8] %vm578, %v577
    %s587 = scalar_lea.vmem [#allocation0], 8
    %v588 = vld [vmem:[%s587] sm:$0xf]
    %589 = vrot.lane.b32.xlu0 %v588, 25
    %v590 = vpop.permute.xlu0 %589
    %vm591 = vcmask 56320
    %s592 = scalar_lea.vmem %s1, 37
    %593 = vst.msk [vmem:[%s592] sm:$0x1] %vm591, %v590
    %s594 = scalar_lea.vmem %s1, 100
    %595 = vst.msk [vmem:[%s594] sm:$0x2] %vm591, %v590
    %s596 = scalar_lea.vmem %s1, 163
    %597 = vst.msk [vmem:[%s596] sm:$0x4] %vm591, %v590
    %s598 = scalar_lea.vmem %s1, 226
    %599 = vst.msk [vmem:[%s598] sm:$0x8] %vm591, %v590
    %v600 = vld [vmem:[#allocation0] sm:$0xf]
    %601 = vrot.lane.b32.xlu0 %v600, 23
    %v602 = vpop.permute.xlu0 %601
    %vm603 = vcmask 56320
    %s604 = scalar_lea.vmem %s1, 17
    %605 = vst.msk [vmem:[%s604] sm:$0x1] %vm603, %v602
    %s606 = scalar_lea.vmem %s1, 80
    %607 = vst.msk [vmem:[%s606] sm:$0x2] %vm603, %v602
    %s608 = scalar_lea.vmem %s1, 143
    %609 = vst.msk [vmem:[%s608] sm:$0x4] %vm603, %v602
    %s610 = scalar_lea.vmem %s1, 206
    %611 = vst.msk [vmem:[%s610] sm:$0x8] %vm603, %v602
    %s612 = scalar_lea.vmem [#allocation0], 16
    %v613 = vld [vmem:[%s612] sm:$0xf]
    %614 = vrot.lane.b32.xlu0 %v613, 20
    %v615 = vpop.permute.xlu0 %614
    %vm616 = vcmask 56320
    %s617 = scalar_lea.vmem %s1, 59
    %618 = vst.msk [vmem:[%s617] sm:$0x1] %vm616, %v615
    %s619 = scalar_lea.vmem %s1, 122
    %620 = vst.msk [vmem:[%s619] sm:$0x2] %vm616, %v615
    %s621 = scalar_lea.vmem %s1, 185
    %622 = vst.msk [vmem:[%s621] sm:$0x4] %vm616, %v615
    %s623 = scalar_lea.vmem %s1, 248
    %624 = vst.msk [vmem:[%s623] sm:$0x8] %vm616, %v615
    %s625 = scalar_lea.vmem [#allocation0], 8
    %v626 = vld [vmem:[%s625] sm:$0xf]
    %627 = vrot.lane.b32.xlu0 %v626, 18
    %v628 = vpop.permute.xlu0 %627
    %vm629 = vcmask 56320
    %s630 = scalar_lea.vmem %s1, 38
    %631 = vst.msk [vmem:[%s630] sm:$0x1] %vm629, %v628
    %s632 = scalar_lea.vmem %s1, 101
    %633 = vst.msk [vmem:[%s632] sm:$0x2] %vm629, %v628
    %s634 = scalar_lea.vmem %s1, 164
    %635 = vst.msk [vmem:[%s634] sm:$0x4] %vm629, %v628
    %s636 = scalar_lea.vmem %s1, 227
    %637 = vst.msk [vmem:[%s636] sm:$0x8] %vm629, %v628
    %v638 = vld [vmem:[#allocation0] sm:$0xf]
    %639 = vrot.lane.b32.xlu0 %v638, 16
    %v640 = vpop.permute.xlu0 %639
    %vm641 = vcmask 56320
    %s642 = scalar_lea.vmem %s1, 18
    %643 = vst.msk [vmem:[%s642] sm:$0x1] %vm641, %v640
    %s644 = scalar_lea.vmem %s1, 81
    %645 = vst.msk [vmem:[%s644] sm:$0x2] %vm641, %v640
    %s646 = scalar_lea.vmem %s1, 144
    %647 = vst.msk [vmem:[%s646] sm:$0x4] %vm641, %v640
    %s648 = scalar_lea.vmem %s1, 207
    %649 = vst.msk [vmem:[%s648] sm:$0x8] %vm641, %v640
    %s650 = scalar_lea.vmem [#allocation0], 16
    %v651 = vld [vmem:[%s650] sm:$0xf]
    %652 = vrot.lane.b32.xlu0 %v651, 13
    %v653 = vpop.permute.xlu0 %652
    %vm654 = vcmask 56320
    %s655 = scalar_lea.vmem %s1, 60
    %656 = vst.msk [vmem:[%s655] sm:$0x1] %vm654, %v653
    %s657 = scalar_lea.vmem %s1, 123
    %658 = vst.msk [vmem:[%s657] sm:$0x2] %vm654, %v653
    %s659 = scalar_lea.vmem %s1, 186
    %660 = vst.msk [vmem:[%s659] sm:$0x4] %vm654, %v653
    %s661 = scalar_lea.vmem %s1, 249
    %662 = vst.msk [vmem:[%s661] sm:$0x8] %vm654, %v653
    %s663 = scalar_lea.vmem [#allocation0], 8
    %v664 = vld [vmem:[%s663] sm:$0xf]
    %665 = vrot.lane.b32.xlu0 %v664, 11
    %v666 = vpop.permute.xlu0 %665
    %vm667 = vcmask 56320
    %s668 = scalar_lea.vmem %s1, 40
    %669 = vst.msk [vmem:[%s668] sm:$0x1] %vm667, %v666
    %s670 = scalar_lea.vmem %s1, 103
    %671 = vst.msk [vmem:[%s670] sm:$0x2] %vm667, %v666
    %s672 = scalar_lea.vmem %s1, 166
    %673 = vst.msk [vmem:[%s672] sm:$0x4] %vm667, %v666
    %s674 = scalar_lea.vmem %s1, 229
    %675 = vst.msk [vmem:[%s674] sm:$0x8] %vm667, %v666
    %v676 = vld [vmem:[#allocation0] sm:$0xf]
    %677 = vrot.lane.b32.xlu0 %v676, 9
    %v678 = vpop.permute.xlu0 %677
    %vm679 = vcmask 56320
    %s680 = scalar_lea.vmem %s1, 19
    %681 = vst.msk [vmem:[%s680] sm:$0x1] %vm679, %v678
    %s682 = scalar_lea.vmem %s1, 82
    %683 = vst.msk [vmem:[%s682] sm:$0x2] %vm679, %v678
    %s684 = scalar_lea.vmem %s1, 145
    %685 = vst.msk [vmem:[%s684] sm:$0x4] %vm679, %v678
    %s686 = scalar_lea.vmem %s1, 208
    %687 = vst.msk [vmem:[%s686] sm:$0x8] %vm679, %v678
    %s688 = scalar_lea.vmem [#allocation0], 16
    %v689 = vld [vmem:[%s688] sm:$0xf]
    %s690 = scalar_lea.vmem [#allocation0], 24
    %v691 = vld [vmem:[%s690] sm:$0xf]
    %vm692 = vcmask 998400
    %v693 = vsel %vm692, %v691, %v689
    %694 = vrot.lane.b32.xlu0 %v693, 6
    %v695 = vpop.permute.xlu0 %694
    %vm696 = vcmask 48128
    %s697 = scalar_lea.vmem %s1, 61
    %698 = vst.msk [vmem:[%s697] sm:$0x1] %vm696, %v695
    %s699 = scalar_lea.vmem %s1, 124
    %700 = vst.msk [vmem:[%s699] sm:$0x2] %vm696, %v695
    %s701 = scalar_lea.vmem %s1, 187
    %702 = vst.msk [vmem:[%s701] sm:$0x4] %vm696, %v695
    %s703 = scalar_lea.vmem %s1, 250
    %704 = vst.msk [vmem:[%s703] sm:$0x8] %vm696, %v695
    %vm705 = vcmask 56368
    %s706 = scalar_lea.vmem %s1, 61
    %707 = vst.msk [vmem:[%s706] sm:$0x1] %vm705, %v695
    %s708 = scalar_lea.vmem %s1, 124
    %709 = vst.msk [vmem:[%s708] sm:$0x2] %vm705, %v695
    %s710 = scalar_lea.vmem %s1, 187
    %711 = vst.msk [vmem:[%s710] sm:$0x4] %vm705, %v695
    %s712 = scalar_lea.vmem %s1, 250
    %713 = vst.msk [vmem:[%s712] sm:$0x8] %vm705, %v695
    %s714 = scalar_lea.vmem [#allocation0], 8
    %v715 = vld [vmem:[%s714] sm:$0xf]
    %s716 = scalar_lea.vmem [#allocation0], 16
    %v717 = vld [vmem:[%s716] sm:$0xf]
    %vm718 = vcmask 1014784
    %v719 = vsel %vm718, %v717, %v715
    %720 = vrot.lane.b32.xlu0 %v719, 4
    %v721 = vpop.permute.xlu0 %720
    %vm722 = vcmask 31744
    %s723 = scalar_lea.vmem %s1, 41
    %724 = vst.msk [vmem:[%s723] sm:$0x1] %vm722, %v721
    %s725 = scalar_lea.vmem %s1, 104
    %726 = vst.msk [vmem:[%s725] sm:$0x2] %vm722, %v721
    %s727 = scalar_lea.vmem %s1, 167
    %728 = vst.msk [vmem:[%s727] sm:$0x4] %vm722, %v721
    %s729 = scalar_lea.vmem %s1, 230
    %730 = vst.msk [vmem:[%s729] sm:$0x8] %vm722, %v721
    %vm731 = vcmask 56352
    %s732 = scalar_lea.vmem %s1, 41
    %733 = vst.msk [vmem:[%s732] sm:$0x1] %vm731, %v721
    %s734 = scalar_lea.vmem %s1, 104
    %735 = vst.msk [vmem:[%s734] sm:$0x2] %vm731, %v721
    %s736 = scalar_lea.vmem %s1, 167
    %737 = vst.msk [vmem:[%s736] sm:$0x4] %vm731, %v721
    %s738 = scalar_lea.vmem %s1, 230
    %739 = vst.msk [vmem:[%s738] sm:$0x8] %vm731, %v721
    %v740 = vld [vmem:[#allocation0] sm:$0xf]
    %s741 = scalar_lea.vmem [#allocation0], 8
    %v742 = vld [vmem:[%s741] sm:$0xf]
    %vm743 = vcmask 1031168
    %v744 = vsel %vm743, %v742, %v740
    %745 = vrot.lane.b32.xlu0 %v744, 2
    %v746 = vpop.permute.xlu0 %745
    %vm747 = vcmask 15360
    %s748 = scalar_lea.vmem %s1, 20
    %749 = vst.msk [vmem:[%s748] sm:$0x1] %vm747, %v746
    %s750 = scalar_lea.vmem %s1, 83
    %751 = vst.msk [vmem:[%s750] sm:$0x2] %vm747, %v746
    %s752 = scalar_lea.vmem %s1, 146
    %753 = vst.msk [vmem:[%s752] sm:$0x4] %vm747, %v746
    %s754 = scalar_lea.vmem %s1, 209
    %755 = vst.msk [vmem:[%s754] sm:$0x8] %vm747, %v746
    %vm756 = vcmask 56336
    %s757 = scalar_lea.vmem %s1, 20
    %758 = vst.msk [vmem:[%s757] sm:$0x1] %vm756, %v746
    %s759 = scalar_lea.vmem %s1, 83
    %760 = vst.msk [vmem:[%s759] sm:$0x2] %vm756, %v746
    %s761 = scalar_lea.vmem %s1, 146
    %762 = vst.msk [vmem:[%s761] sm:$0x4] %vm756, %v746
    %s763 = scalar_lea.vmem %s1, 209
    %764 = vst.msk [vmem:[%s763] sm:$0x8] %vm756, %v746

// kernel: bilateral_roi_heads.1
$region0: #{bilateral_roi_heads.1}
  #allocation0 [shape = 'u32[]', space=smem, size = 0x4, offset = 0x4, fixed_abs, tag = 'smem constant byte address 0x4 - core index']
  #allocation1 [shape = 'u32[144,128]{1,0:T(1,128)}', space=vmem, size = 0x12000, scoped, tag = 'internal scratch']
  #allocation2 [shape = 'f32[256,128]{1,0:T(8,128)}', space=vmem, size = 0x20000, scoped, tag = 'scratch operand']
  %s0 = inlined_call_operand.vmem [shape: bf16[256,256], index: 0, kind: input, shape index: {}]
  %s1 = inlined_call_operand.vmem [shape: bf16[256,256], index: 1, kind: input, shape index: {}]
  %s2 = inlined_call_operand.vmem [shape: bf16[256,128], index: 2, kind: input, shape index: {}]
  %s3 = inlined_call_operand.vmem [shape: bf16[256,128], index: 3, kind: input, shape index: {}]
  %s4 = inlined_call_operand.vmem [shape: f32[1,128], index: 4, kind: input, shape index: {}]
  %s5 = inlined_call_operand.vmem [shape: bf16[128,128], index: 5, kind: input, shape index: {}]
  %s6 = inlined_call_operand.vmem [shape: f32[1,128], index: 6, kind: input, shape index: {}]
  %s7 = inlined_call_operand.vmem [shape: bf16[128,128], index: 7, kind: input, shape index: {}]
  %s8 = inlined_call_operand.vmem [shape: f32[1,128], index: 8, kind: input, shape index: {}]
  %s9 = inlined_call_operand.vmem [shape: f32[256,128], index: 9, kind: output, shape index: {}]
  %s10 = sld [smem:[#allocation0]]
  $region54: #{bilateral_roi_heads.1} parent=0
    _
  %s12 = ssub.s32 1, %s10
  %s13 = scalar_select 0, %s12, %s10
  // Predicated region
  $region2: #{bilateral_roi_heads.1} parent=0 // pred_check
    _
  $region3: #{bilateral_roi_heads.1} parent=0 // pred_check_branch
    %15 = sbr.rel (0) target = $region5
  $region4: #{bilateral_roi_heads.1} parent=0 // pred_region
    _
  $region5: #{bilateral_roi_heads.1} parent=0 // pred_fallthru
    _
  // Predicated region
  $region6: #{bilateral_roi_heads.1} parent=0 // pred_check
    _
  $region7: #{bilateral_roi_heads.1} parent=0 // pred_check_branch
    %17 = sbr.rel (0) target = $region9
  $region8: #{bilateral_roi_heads.1} parent=0 // pred_region
    _
  $region9: #{bilateral_roi_heads.1} parent=0 // pred_fallthru
    _
  // Predicated region
  $region10: #{bilateral_roi_heads.1} parent=0 // pred_check
    _
  $region11: #{bilateral_roi_heads.1} parent=0 // pred_check_branch
    %19 = sbr.rel (0) target = $region13
  $region12: #{bilateral_roi_heads.1} parent=0 // pred_region
    _
  $region13: #{bilateral_roi_heads.1} parent=0 // pred_fallthru
    _
  // Predicated region
  $region14: #{bilateral_roi_heads.1} parent=0 // pred_check
    _
  $region15: #{bilateral_roi_heads.1} parent=0 // pred_check_branch
    %21 = sbr.rel (0) target = $region17
  $region16: #{bilateral_roi_heads.1} parent=0 // pred_region
    _
  $region17: #{bilateral_roi_heads.1} parent=0 // pred_fallthru
    _
  // Predicated region
  $region18: #{bilateral_roi_heads.1} parent=0 // pred_check
    _
  $region19: #{bilateral_roi_heads.1} parent=0 // pred_check_branch
    %23 = sbr.rel (0) target = $region21
  $region20: #{bilateral_roi_heads.1} parent=0 // pred_region
    _
  $region21: #{bilateral_roi_heads.1} parent=0 // pred_fallthru
    _
  // Predicated region
  $region22: #{bilateral_roi_heads.1} parent=0 // pred_check
    _
  $region23: #{bilateral_roi_heads.1} parent=0 // pred_check_branch
    %25 = sbr.rel (0) target = $region25
  $region24: #{bilateral_roi_heads.1} parent=0 // pred_region
    _
  $region25: #{bilateral_roi_heads.1} parent=0 // pred_fallthru
    _
  // Predicated region
  $region26: #{bilateral_roi_heads.1} parent=0 // pred_check
    _
  $region27: #{bilateral_roi_heads.1} parent=0 // pred_check_branch
    %27 = sbr.rel (0) target = $region29
  $region28: #{bilateral_roi_heads.1} parent=0 // pred_region
    _
  $region29: #{bilateral_roi_heads.1} parent=0 // pred_fallthru
    _
  // Predicated region
  $region30: #{bilateral_roi_heads.1} parent=0 // pred_check
    _
  $region31: #{bilateral_roi_heads.1} parent=0 // pred_check_branch
    %29 = sbr.rel (0) target = $region33
  $region32: #{bilateral_roi_heads.1} parent=0 // pred_region
    _
  $region33: #{bilateral_roi_heads.1} parent=0 // pred_fallthru
    _
  // Predicated region
  $region34: #{bilateral_roi_heads.1} parent=0 // pred_check
    _
  $region35: #{bilateral_roi_heads.1} parent=0 // pred_check_branch
    %31 = sbr.rel (0) target = $region37
  $region36: #{bilateral_roi_heads.1} parent=0 // pred_region
    _
  $region37: #{bilateral_roi_heads.1} parent=0 // pred_fallthru
    _
  %p33 = scmp.eq.s32.totalorder 0, 0
  // Predicated region
  $region38: #{bilateral_roi_heads.1} parent=0 // pred_check
    %p34 = pneg %p33
  $region39: #{bilateral_roi_heads.1} parent=0 // pred_check_branch
    %36 = sbr.rel (%p34) target = $region41
  $region40: #{bilateral_roi_heads.1} parent=0 // pred_region
    %37 = vst [vmem:[#allocation2] sm:$0xff] 0.0
    %38 = vst [vmem:[#allocation2 + $0x8] sm:$0xff] 0.0
    %39 = vst [vmem:[#allocation2 + $0x10] sm:$0xff] 0.0
    %40 = vst [vmem:[#allocation2 + $0x18] sm:$0xff] 0.0
    %41 = vst [vmem:[#allocation2 + $0x20] sm:$0xff] 0.0
    %42 = vst [vmem:[#allocation2 + $0x28] sm:$0xff] 0.0
    %43 = vst [vmem:[#allocation2 + $0x30] sm:$0xff] 0.0
    %44 = vst [vmem:[#allocation2 + $0x38] sm:$0xff] 0.0
    %45 = vst [vmem:[#allocation2 + $0x40] sm:$0xff] 0.0
    %46 = vst [vmem:[#allocation2 + $0x48] sm:$0xff] 0.0
    %47 = vst [vmem:[#allocation2 + $0x50] sm:$0xff] 0.0
    %48 = vst [vmem:[#allocation2 + $0x58] sm:$0xff] 0.0
    %49 = vst [vmem:[#allocation2 + $0x60] sm:$0xff] 0.0
    %50 = vst [vmem:[#allocation2 + $0x68] sm:$0xff] 0.0
    %51 = vst [vmem:[#allocation2 + $0x70] sm:$0xff] 0.0
    %52 = vst [vmem:[#allocation2 + $0x78] sm:$0xff] 0.0
    %53 = vst [vmem:[#allocation2 + $0x80] sm:$0xff] 0.0
    %54 = vst [vmem:[#allocation2 + $0x88] sm:$0xff] 0.0
    %55 = vst [vmem:[#allocation2 + $0x90] sm:$0xff] 0.0
    %56 = vst [vmem:[#allocation2 + $0x98] sm:$0xff] 0.0
    %57 = vst [vmem:[#allocation2 + $0xa0] sm:$0xff] 0.0
    %58 = vst [vmem:[#allocation2 + $0xa8] sm:$0xff] 0.0
    %59 = vst [vmem:[#allocation2 + $0xb0] sm:$0xff] 0.0
    %60 = vst [vmem:[#allocation2 + $0xb8] sm:$0xff] 0.0
    %61 = vst [vmem:[#allocation2 + $0xc0] sm:$0xff] 0.0
    %62 = vst [vmem:[#allocation2 + $0xc8] sm:$0xff] 0.0
    %63 = vst [vmem:[#allocation2 + $0xd0] sm:$0xff] 0.0
    %64 = vst [vmem:[#allocation2 + $0xd8] sm:$0xff] 0.0
    %65 = vst [vmem:[#allocation2 + $0xe0] sm:$0xff] 0.0
    %66 = vst [vmem:[#allocation2 + $0xe8] sm:$0xff] 0.0
    %67 = vst [vmem:[#allocation2 + $0xf0] sm:$0xff] 0.0
    %68 = vst [vmem:[#allocation2 + $0xf8] sm:$0xff] 0.0
  $region41: #{bilateral_roi_heads.1} parent=0 // pred_fallthru
    _
  %v69 = vld [vmem:[#allocation2] sm:$0xff]
  %v70 = vld [vmem:[#allocation2 + $0x8] sm:$0xff]
  %v71 = vld [vmem:[#allocation2 + $0x10] sm:$0xff]
  %v72 = vld [vmem:[#allocation2 + $0x18] sm:$0xff]
  %v73 = vld [vmem:[#allocation2 + $0x20] sm:$0xff]
  %v74 = vld [vmem:[#allocation2 + $0x28] sm:$0xff]
  %v75 = vld [vmem:[#allocation2 + $0x30] sm:$0xff]
  %v76 = vld [vmem:[#allocation2 + $0x38] sm:$0xff]
  %v77 = vld [vmem:[#allocation2 + $0x40] sm:$0xff]
  %v78 = vld [vmem:[#allocation2 + $0x48] sm:$0xff]
  %v79 = vld [vmem:[#allocation2 + $0x50] sm:$0xff]
  %v80 = vld [vmem:[#allocation2 + $0x58] sm:$0xff]
  %v81 = vld [vmem:[#allocation2 + $0x60] sm:$0xff]
  %v82 = vld [vmem:[#allocation2 + $0x68] sm:$0xff]
  %v83 = vld [vmem:[#allocation2 + $0x70] sm:$0xff]
  %v84 = vld [vmem:[#allocation2 + $0x78] sm:$0xff]
  %v85 = vld [vmem:[#allocation2 + $0x80] sm:$0xff]
  %v86 = vld [vmem:[#allocation2 + $0x88] sm:$0xff]
  %v87 = vld [vmem:[#allocation2 + $0x90] sm:$0xff]
  %v88 = vld [vmem:[#allocation2 + $0x98] sm:$0xff]
  %v89 = vld [vmem:[#allocation2 + $0xa0] sm:$0xff]
  %v90 = vld [vmem:[#allocation2 + $0xa8] sm:$0xff]
  %v91 = vld [vmem:[#allocation2 + $0xb0] sm:$0xff]
  %v92 = vld [vmem:[#allocation2 + $0xb8] sm:$0xff]
  %v93 = vld [vmem:[#allocation2 + $0xc0] sm:$0xff]
  %v94 = vld [vmem:[#allocation2 + $0xc8] sm:$0xff]
  %v95 = vld [vmem:[#allocation2 + $0xd0] sm:$0xff]
  %v96 = vld [vmem:[#allocation2 + $0xd8] sm:$0xff]
  %v97 = vld [vmem:[#allocation2 + $0xe0] sm:$0xff]
  %v98 = vld [vmem:[#allocation2 + $0xe8] sm:$0xff]
  %v99 = vld [vmem:[#allocation2 + $0xf0] sm:$0xff]
  %v100 = vld [vmem:[#allocation2 + $0xf8] sm:$0xff]
  %v101 = vld [vmem:[%s0] sm:$0xff]
  %v102 = vld [vmem:[%s0 + $0x8] sm:$0xff]
  %v103 = vld [vmem:[%s0 + $0x10] sm:$0xff]
  %v104 = vld [vmem:[%s0 + $0x18] sm:$0xff]
  %v105 = vld [vmem:[%s0 + $0x20] sm:$0xff]
  %v106 = vld [vmem:[%s0 + $0x28] sm:$0xff]
  %v107 = vld [vmem:[%s0 + $0x30] sm:$0xff]
  %v108 = vld [vmem:[%s0 + $0x38] sm:$0xff]
  %v109 = vld [vmem:[%s0 + $0x40] sm:$0xff]
  %v110 = vld [vmem:[%s0 + $0x48] sm:$0xff]
  %v111 = vld [vmem:[%s0 + $0x50] sm:$0xff]
  %v112 = vld [vmem:[%s0 + $0x58] sm:$0xff]
  %v113 = vld [vmem:[%s0 + $0x60] sm:$0xff]
  %v114 = vld [vmem:[%s0 + $0x68] sm:$0xff]
  %v115 = vld [vmem:[%s0 + $0x70] sm:$0xff]
  %v116 = vld [vmem:[%s0 + $0x78] sm:$0xff]
  %v117 = vld [vmem:[%s0 + $0x80] sm:$0xff]
  %v118 = vld [vmem:[%s0 + $0x88] sm:$0xff]
  %v119 = vld [vmem:[%s0 + $0x90] sm:$0xff]
  %v120 = vld [vmem:[%s0 + $0x98] sm:$0xff]
  %v121 = vld [vmem:[%s0 + $0xa0] sm:$0xff]
  %v122 = vld [vmem:[%s0 + $0xa8] sm:$0xff]
  %v123 = vld [vmem:[%s0 + $0xb0] sm:$0xff]
  %v124 = vld [vmem:[%s0 + $0xb8] sm:$0xff]
  %v125 = vld [vmem:[%s0 + $0xc0] sm:$0xff]
  %v126 = vld [vmem:[%s0 + $0xc8] sm:$0xff]
  %v127 = vld [vmem:[%s0 + $0xd0] sm:$0xff]
  %v128 = vld [vmem:[%s0 + $0xd8] sm:$0xff]
  %v129 = vld [vmem:[%s0 + $0xe0] sm:$0xff]
  %v130 = vld [vmem:[%s0 + $0xe8] sm:$0xff]
  %v131 = vld [vmem:[%s0 + $0xf0] sm:$0xff]
  %v132 = vld [vmem:[%s0 + $0xf8] sm:$0xff]
  %v133 = vld [vmem:[%s2] sm:$0xf]
  %v134 = vld [vmem:[%s2 + $0x4] sm:$0xf]
  %v135 = vld [vmem:[%s2 + $0x8] sm:$0xf]
  %v136 = vld [vmem:[%s2 + $0xc] sm:$0xf]
  %v137 = vld [vmem:[%s2 + $0x10] sm:$0xf]
  %v138 = vld [vmem:[%s2 + $0x14] sm:$0xf]
  %v139 = vld [vmem:[%s2 + $0x18] sm:$0xf]
  %v140 = vld [vmem:[%s2 + $0x1c] sm:$0xf]
  %v141 = vld [vmem:[%s2 + $0x20] sm:$0xf]
  %v142 = vld [vmem:[%s2 + $0x24] sm:$0xf]
  %v143 = vld [vmem:[%s2 + $0x28] sm:$0xf]
  %v144 = vld [vmem:[%s2 + $0x2c] sm:$0xf]
  %v145 = vld [vmem:[%s2 + $0x30] sm:$0xf]
  %v146 = vld [vmem:[%s2 + $0x34] sm:$0xf]
  %v147 = vld [vmem:[%s2 + $0x38] sm:$0xf]
  %v148 = vld [vmem:[%s2 + $0x3c] sm:$0xf]
  %v149 = vld [vmem:[%s2 + $0x40] sm:$0xf]
  %v150 = vld [vmem:[%s2 + $0x44] sm:$0xf]
  %v151 = vld [vmem:[%s2 + $0x48] sm:$0xf]
  %v152 = vld [vmem:[%s2 + $0x4c] sm:$0xf]
  %v153 = vld [vmem:[%s2 + $0x50] sm:$0xf]
  %v154 = vld [vmem:[%s2 + $0x54] sm:$0xf]
  %v155 = vld [vmem:[%s2 + $0x58] sm:$0xf]
  %v156 = vld [vmem:[%s2 + $0x5c] sm:$0xf]
  %v157 = vld [vmem:[%s2 + $0x60] sm:$0xf]
  %v158 = vld [vmem:[%s2 + $0x64] sm:$0xf]
  %v159 = vld [vmem:[%s2 + $0x68] sm:$0xf]
  %v160 = vld [vmem:[%s2 + $0x6c] sm:$0xf]
  %v161 = vld [vmem:[%s2 + $0x70] sm:$0xf]
  %v162 = vld [vmem:[%s2 + $0x74] sm:$0xf]
  %v163 = vld [vmem:[%s2 + $0x78] sm:$0xf]
  %v164 = vld [vmem:[%s2 + $0x7c] sm:$0xf]
  %v197 = vunpack.c.l.b16 %v101
  %v198 = vunpack.c.h.b16 %v101
  %v199 = vunpack.c.l.b16 %v102
  %v200 = vunpack.c.h.b16 %v102
  %v201 = vunpack.c.l.b16 %v103
  %v202 = vunpack.c.h.b16 %v103
  %v203 = vunpack.c.l.b16 %v104
  %v204 = vunpack.c.h.b16 %v104
  %v205 = vunpack.c.l.b16 %v105
  %v206 = vunpack.c.h.b16 %v105
  %v207 = vunpack.c.l.b16 %v106
  %v208 = vunpack.c.h.b16 %v106
  %v209 = vunpack.c.l.b16 %v107
  %v210 = vunpack.c.h.b16 %v107
  %v211 = vunpack.c.l.b16 %v108
  %v212 = vunpack.c.h.b16 %v108
  %v213 = vunpack.c.l.b16 %v109
  %v214 = vunpack.c.h.b16 %v109
  %v215 = vunpack.c.l.b16 %v110
  %v216 = vunpack.c.h.b16 %v110
  %v217 = vunpack.c.l.b16 %v111
  %v218 = vunpack.c.h.b16 %v111
  %v219 = vunpack.c.l.b16 %v112
  %v220 = vunpack.c.h.b16 %v112
  %v221 = vunpack.c.l.b16 %v113
  %v222 = vunpack.c.h.b16 %v113
  %v223 = vunpack.c.l.b16 %v114
  %v224 = vunpack.c.h.b16 %v114
  %v225 = vunpack.c.l.b16 %v115
  %v226 = vunpack.c.h.b16 %v115
  %v227 = vunpack.c.l.b16 %v116
  %v228 = vunpack.c.h.b16 %v116
  %v229 = vunpack.c.l.b16 %v117
  %v230 = vunpack.c.h.b16 %v117
  %v231 = vunpack.c.l.b16 %v118
  %v232 = vunpack.c.h.b16 %v118
  %v233 = vunpack.c.l.b16 %v119
  %v234 = vunpack.c.h.b16 %v119
  %v235 = vunpack.c.l.b16 %v120
  %v236 = vunpack.c.h.b16 %v120
  %v237 = vunpack.c.l.b16 %v121
  %v238 = vunpack.c.h.b16 %v121
  %v239 = vunpack.c.l.b16 %v122
  %v240 = vunpack.c.h.b16 %v122
  %v241 = vunpack.c.l.b16 %v123
  %v242 = vunpack.c.h.b16 %v123
  %v243 = vunpack.c.l.b16 %v124
  %v244 = vunpack.c.h.b16 %v124
  %v245 = vunpack.c.l.b16 %v125
  %v246 = vunpack.c.h.b16 %v125
  %v247 = vunpack.c.l.b16 %v126
  %v248 = vunpack.c.h.b16 %v126
  %v249 = vunpack.c.l.b16 %v127
  %v250 = vunpack.c.h.b16 %v127
  %v251 = vunpack.c.l.b16 %v128
  %v252 = vunpack.c.h.b16 %v128
  %v253 = vunpack.c.l.b16 %v129
  %v254 = vunpack.c.h.b16 %v129
  %v255 = vunpack.c.l.b16 %v130
  %v256 = vunpack.c.h.b16 %v130
  %v257 = vunpack.c.l.b16 %v131
  %v258 = vunpack.c.h.b16 %v131
  %v259 = vunpack.c.l.b16 %v132
  %v260 = vunpack.c.h.b16 %v132
  %v261 = vpack.c.b16 %v199, %v197
  %v262 = vpack.c.b16 %v200, %v198
  %v263 = vpack.c.b16 %v203, %v201
  %v264 = vpack.c.b16 %v204, %v202
  %v265 = vpack.c.b16 %v207, %v205
  %v266 = vpack.c.b16 %v208, %v206
  %v267 = vpack.c.b16 %v211, %v209
  %v268 = vpack.c.b16 %v212, %v210
  %v269 = vpack.c.b16 %v215, %v213
  %v270 = vpack.c.b16 %v216, %v214
  %v271 = vpack.c.b16 %v219, %v217
  %v272 = vpack.c.b16 %v220, %v218
  %v273 = vpack.c.b16 %v223, %v221
  %v274 = vpack.c.b16 %v224, %v222
  %v275 = vpack.c.b16 %v227, %v225
  %v276 = vpack.c.b16 %v228, %v226
  %v277 = vpack.c.b16 %v231, %v229
  %v278 = vpack.c.b16 %v232, %v230
  %v279 = vpack.c.b16 %v235, %v233
  %v280 = vpack.c.b16 %v236, %v234
  %v281 = vpack.c.b16 %v239, %v237
  %v282 = vpack.c.b16 %v240, %v238
  %v283 = vpack.c.b16 %v243, %v241
  %v284 = vpack.c.b16 %v244, %v242
  %v285 = vpack.c.b16 %v247, %v245
  %v286 = vpack.c.b16 %v248, %v246
  %v287 = vpack.c.b16 %v251, %v249
  %v288 = vpack.c.b16 %v252, %v250
  %v289 = vpack.c.b16 %v255, %v253
  %v290 = vpack.c.b16 %v256, %v254
  %v291 = vpack.c.b16 %v259, %v257
  %v292 = vpack.c.b16 %v260, %v258
  %v357 = vunpack.c.l.b16 %v133
  %v358 = vunpack.c.l.b16 %v134
  %v359 = vunpack.c.l.b16 %v135
  %v360 = vunpack.c.l.b16 %v136
  %v361 = vunpack.c.l.b16 %v137
  %v362 = vunpack.c.l.b16 %v138
  %v363 = vunpack.c.l.b16 %v139
  %v364 = vunpack.c.l.b16 %v140
  %v365 = vunpack.c.l.b16 %v141
  %v366 = vunpack.c.l.b16 %v142
  %v367 = vunpack.c.l.b16 %v143
  %v368 = vunpack.c.l.b16 %v144
  %v369 = vunpack.c.l.b16 %v145
  %v370 = vunpack.c.l.b16 %v146
  %v371 = vunpack.c.l.b16 %v147
  %v372 = vunpack.c.l.b16 %v148
  %v373 = vunpack.c.l.b16 %v149
  %v374 = vunpack.c.l.b16 %v150
  %v375 = vunpack.c.l.b16 %v151
  %v376 = vunpack.c.l.b16 %v152
  %v377 = vunpack.c.l.b16 %v153
  %v378 = vunpack.c.l.b16 %v154
  %v379 = vunpack.c.l.b16 %v155
  %v380 = vunpack.c.l.b16 %v156
  %v381 = vunpack.c.l.b16 %v157
  %v382 = vunpack.c.l.b16 %v158
  %v383 = vunpack.c.l.b16 %v159
  %v384 = vunpack.c.l.b16 %v160
  %v385 = vunpack.c.l.b16 %v161
  %v386 = vunpack.c.l.b16 %v162
  %v387 = vunpack.c.l.b16 %v163
  %v388 = vunpack.c.l.b16 %v164
  %v389 = vpack.c.b16 %v358, %v357
  %v390 = vpack.c.b16 %v360, %v359
  %v391 = vpack.c.b16 %v362, %v361
  %v392 = vpack.c.b16 %v364, %v363
  %v393 = vpack.c.b16 %v366, %v365
  %v394 = vpack.c.b16 %v368, %v367
  %v395 = vpack.c.b16 %v370, %v369
  %v396 = vpack.c.b16 %v372, %v371
  %v397 = vpack.c.b16 %v374, %v373
  %v398 = vpack.c.b16 %v376, %v375
  %v399 = vpack.c.b16 %v378, %v377
  %v400 = vpack.c.b16 %v380, %v379
  %v401 = vpack.c.b16 %v382, %v381
  %v402 = vpack.c.b16 %v384, %v383
  %v403 = vpack.c.b16 %v386, %v385
  %v404 = vpack.c.b16 %v388, %v387
  %421 = vmatprep.subr.bf16.mxu0 0
  %422 = vmatpush1.bf16.msra.mxu0 %v389
  %423 = vmatprep.subr.bf16.mxu0 0
  %424 = vmatpush1.bf16.msra.mxu0 %v390
  %425 = vmatprep.subr.bf16.mxu0 0
  %426 = vmatpush1.bf16.msra.mxu0 %v391
  %427 = vmatprep.subr.bf16.mxu0 0
  %428 = vmatpush1.bf16.msra.mxu0 %v392
  %429 = vmatprep.subr.bf16.mxu0 0
  %430 = vmatpush1.bf16.msra.mxu0 %v393
  %431 = vmatprep.subr.bf16.mxu0 0
  %432 = vmatpush1.bf16.msra.mxu0 %v394
  %433 = vmatprep.subr.bf16.mxu0 0
  %434 = vmatpush1.bf16.msra.mxu0 %v395
  %435 = vmatprep.subr.bf16.mxu0 0
  %436 = vmatpush1.bf16.msra.mxu0 %v396
  %437 = vmatprep.subr.bf16.mxu0 0
  %438 = vmatpush1.bf16.msra.mxu0 %v397
  %439 = vmatprep.subr.bf16.mxu0 0
  %440 = vmatpush1.bf16.msra.mxu0 %v398
  %441 = vmatprep.subr.bf16.mxu0 0
  %442 = vmatpush1.bf16.msra.mxu0 %v399
  %443 = vmatprep.subr.bf16.mxu0 0
  %444 = vmatpush1.bf16.msra.mxu0 %v400
  %445 = vmatprep.subr.bf16.mxu0 0
  %446 = vmatpush1.bf16.msra.mxu0 %v401
  %447 = vmatprep.subr.bf16.mxu0 0
  %448 = vmatpush1.bf16.msra.mxu0 %v402
  %449 = vmatprep.subr.bf16.mxu0 0
  %450 = vmatpush1.bf16.msra.mxu0 %v403
  %451 = vmatprep.subr.bf16.mxu0 0
  %452 = vmatpush1.bf16.msra.mxu0 %v404
  %453 = vmatprep.mubr.bf16.mxu0 %v262
  %454 = vmatmul.mubr.bf16.gmra.mrb[0].mxu0 %v261
  %v455 = vpop.f32.mrb[0].mxu0
  %v456 = vadd.f32 0.0, %v455
  %v457 = vpop.f32.mrb[0].mxu0
  %v458 = vpop.f32.mrb[0].mxu0
  %v459 = vadd.f32 0.0, %v458
  %v460 = vpop.f32.mrb[0].mxu0
  %461 = vmatprep.mubr.bf16.mxu0 %v264
  %462 = vmatmul.mubr.bf16.gmra.mrb[0].mxu0 %v263
  %v463 = vpop.f32.mrb[0].mxu0
  %v464 = vadd.f32 0.0, %v463
  %v465 = vpop.f32.mrb[0].mxu0
  %v466 = vpop.f32.mrb[0].mxu0
  %v467 = vadd.f32 0.0, %v466
  %v468 = vpop.f32.mrb[0].mxu0
  %469 = vmatprep.mubr.bf16.mxu0 %v266
  %470 = vmatmul.mubr.bf16.gmra.mrb[0].mxu0 %v265
  %v471 = vpop.f32.mrb[0].mxu0
  %v472 = vadd.f32 0.0, %v471
  %v473 = vpop.f32.mrb[0].mxu0
  %v474 = vpop.f32.mrb[0].mxu0
  %v475 = vadd.f32 0.0, %v474
  %v476 = vpop.f32.mrb[0].mxu0
  %477 = vmatprep.mubr.bf16.mxu0 %v268
  %478 = vmatmul.mubr.bf16.gmra.mrb[0].mxu0 %v267
  %v479 = vpop.f32.mrb[0].mxu0
  %v480 = vadd.f32 0.0, %v479
  %v481 = vpop.f32.mrb[0].mxu0
  %v482 = vpop.f32.mrb[0].mxu0
  %v483 = vadd.f32 0.0, %v482
  %v484 = vpop.f32.mrb[0].mxu0
  %485 = vmatprep.mubr.bf16.mxu0 %v270
  %486 = vmatmul.mubr.bf16.gmra.mrb[0].mxu0 %v269
  %v487 = vpop.f32.mrb[0].mxu0
  %v488 = vadd.f32 0.0, %v487
  %v489 = vpop.f32.mrb[0].mxu0
  %v490 = vpop.f32.mrb[0].mxu0
  %v491 = vadd.f32 0.0, %v490
  %v492 = vpop.f32.mrb[0].mxu0
  %493 = vmatprep.mubr.bf16.mxu0 %v272
  %494 = vmatmul.mubr.bf16.gmra.mrb[0].mxu0 %v271
  %v495 = vpop.f32.mrb[0].mxu0
  %v496 = vadd.f32 0.0, %v495
  %v497 = vpop.f32.mrb[0].mxu0
  %v498 = vpop.f32.mrb[0].mxu0
  %v499 = vadd.f32 0.0, %v498
  %v500 = vpop.f32.mrb[0].mxu0
  %501 = vmatprep.mubr.bf16.mxu0 %v274
  %502 = vmatmul.mubr.bf16.gmra.mrb[0].mxu0 %v273
  %v503 = vpop.f32.mrb[0].mxu0
  %v504 = vadd.f32 0.0, %v503
  %v505 = vpop.f32.mrb[0].mxu0
  %v506 = vpop.f32.mrb[0].mxu0
  %v507 = vadd.f32 0.0, %v506
  %v508 = vpop.f32.mrb[0].mxu0
  %509 = vmatprep.mubr.bf16.mxu0 %v276
  %510 = vmatmul.mubr.bf16.gmra.mrb[0].mxu0 %v275
  %v511 = vpop.f32.mrb[0].mxu0
  %v512 = vadd.f32 0.0, %v511
  %v513 = vpop.f32.mrb[0].mxu0
  %v514 = vpop.f32.mrb[0].mxu0
  %v515 = vadd.f32 0.0, %v514
  %v516 = vpop.f32.mrb[0].mxu0
  %517 = vmatprep.mubr.bf16.mxu0 %v278
  %518 = vmatmul.mubr.bf16.gmra.mrb[0].mxu0 %v277
  %v519 = vpop.f32.mrb[0].mxu0
  %v520 = vadd.f32 0.0, %v519
  %v521 = vpop.f32.mrb[0].mxu0
  %v522 = vpop.f32.mrb[0].mxu0
  %v523 = vadd.f32 0.0, %v522
  %v524 = vpop.f32.mrb[0].mxu0
  %525 = vmatprep.mubr.bf16.mxu0 %v280
  %526 = vmatmul.mubr.bf16.gmra.mrb[0].mxu0 %v279
  %v527 = vpop.f32.mrb[0].mxu0
  %v528 = vadd.f32 0.0, %v527
  %v529 = vpop.f32.mrb[0].mxu0
  %v530 = vpop.f32.mrb[0].mxu0
  %v531 = vadd.f32 0.0, %v530
  %v532 = vpop.f32.mrb[0].mxu0
  %533 = vmatprep.mubr.bf16.mxu0 %v282
  %534 = vmatmul.mubr.bf16.gmra.mrb[0].mxu0 %v281
  %v535 = vpop.f32.mrb[0].mxu0
  %v536 = vadd.f32 0.0, %v535
  %v537 = vpop.f32.mrb[0].mxu0
  %v538 = vpop.f32.mrb[0].mxu0
  %v539 = vadd.f32 0.0, %v538
  %v540 = vpop.f32.mrb[0].mxu0
  %541 = vmatprep.mubr.bf16.mxu0 %v284
  %542 = vmatmul.mubr.bf16.gmra.mrb[0].mxu0 %v283
  %v543 = vpop.f32.mrb[0].mxu0
  %v544 = vadd.f32 0.0, %v543
  %v545 = vpop.f32.mrb[0].mxu0
  %v546 = vpop.f32.mrb[0].mxu0
  %v547 = vadd.f32 0.0, %v546
  %v548 = vpop.f32.mrb[0].mxu0
  %549 = vmatprep.mubr.bf16.mxu0 %v286
  %550 = vmatmul.mubr.bf16.gmra.mrb[0].mxu0 %v285
  %v551 = vpop.f32.mrb[0].mxu0
  %v552 = vadd.f32 0.0, %v551
  %v553 = vpop.f32.mrb[0].mxu0
  %v554 = vpop.f32.mrb[0].mxu0
  %v555 = vadd.f32 0.0, %v554
  %v556 = vpop.f32.mrb[0].mxu0
  %557 = vmatprep.mubr.bf16.mxu0 %v288
  %558 = vmatmul.mubr.bf16.gmra.mrb[0].mxu0 %v287
  %v559 = vpop.f32.mrb[0].mxu0
  %v560 = vadd.f32 0.0, %v559
  %v561 = vpop.f32.mrb[0].mxu0
  %v562 = vpop.f32.mrb[0].mxu0
  %v563 = vadd.f32 0.0, %v562
  %v564 = vpop.f32.mrb[0].mxu0
  %565 = vmatprep.mubr.bf16.mxu0 %v290
  %566 = vmatmul.mubr.bf16.gmra.mrb[0].mxu0 %v289
  %v567 = vpop.f32.mrb[0].mxu0
  %v568 = vadd.f32 0.0, %v567
  %v569 = vpop.f32.mrb[0].mxu0
  %v570 = vpop.f32.mrb[0].mxu0
  %v571 = vadd.f32 0.0, %v570
  %v572 = vpop.f32.mrb[0].mxu0
  %573 = vmatprep.mubr.bf16.mxu0 %v292
  %574 = vmatmul.mubr.bf16.gmra.mrb[0].mxu0 %v291
  %v575 = vpop.f32.mrb[0].mxu0
  %v576 = vadd.f32 0.0, %v575
  %v577 = vpop.f32.mrb[0].mxu0
  %v578 = vpop.f32.mrb[0].mxu0
  %v579 = vadd.f32 0.0, %v578
  %v580 = vpop.f32.mrb[0].mxu0
  %581 = vdwg.mxu0
  %v582 = vadd.f32 %v69, %v456
  %v583 = vadd.f32 %v70, %v459
  %v584 = vadd.f32 %v71, %v464
  %v585 = vadd.f32 %v72, %v467
  %v586 = vadd.f32 %v73, %v472
  %v587 = vadd.f32 %v74, %v475
  %v588 = vadd.f32 %v75, %v480
  %v589 = vadd.f32 %v76, %v483
  %v590 = vadd.f32 %v77, %v488
  %v591 = vadd.f32 %v78, %v491
  %v592 = vadd.f32 %v79, %v496
  %v593 = vadd.f32 %v80, %v499
  %v594 = vadd.f32 %v81, %v504
  %v595 = vadd.f32 %v82, %v507
  %v596 = vadd.f32 %v83, %v512
  %v597 = vadd.f32 %v84, %v515
  %v598 = vadd.f32 %v85, %v520
  %v599 = vadd.f32 %v86, %v523
  %v600 = vadd.f32 %v87, %v528
  %v601 = vadd.f32 %v88, %v531
  %v602 = vadd.f32 %v89, %v536
  %v603 = vadd.f32 %v90, %v539
  %v604 = vadd.f32 %v91, %v544
  %v605 = vadd.f32 %v92, %v547
  %v606 = vadd.f32 %v93, %v552
  %v607 = vadd.f32 %v94, %v555
  %v608 = vadd.f32 %v95, %v560
  %v609 = vadd.f32 %v96, %v563
  %v610 = vadd.f32 %v97, %v568
  %v611 = vadd.f32 %v98, %v571
  %v612 = vadd.f32 %v99, %v576
  %v613 = vadd.f32 %v100, %v579
  %614 = vst [vmem:[#allocation2] sm:$0xff] %v582
  %615 = vst [vmem:[#allocation2 + $0x8] sm:$0xff] %v583
  %616 = vst [vmem:[#allocation2 + $0x10] sm:$0xff] %v584
  %617 = vst [vmem:[#allocation2 + $0x18] sm:$0xff] %v585
  %618 = vst [vmem:[#allocation2 + $0x20] sm:$0xff] %v586
  %619 = vst [vmem:[#allocation2 + $0x28] sm:$0xff] %v587
  %620 = vst [vmem:[#allocation2 + $0x30] sm:$0xff] %v588
  %621 = vst [vmem:[#allocation2 + $0x38] sm:$0xff] %v589
  %622 = vst [vmem:[#allocation2 + $0x40] sm:$0xff] %v590
  %623 = vst [vmem:[#allocation2 + $0x48] sm:$0xff] %v591
  %624 = vst [vmem:[#allocation2 + $0x50] sm:$0xff] %v592
  %625 = vst [vmem:[#allocation2 + $0x58] sm:$0xff] %v593
  %626 = vst [vmem:[#allocation2 + $0x60] sm:$0xff] %v594
  %627 = vst [vmem:[#allocation2 + $0x68] sm:$0xff] %v595
  %628 = vst [vmem:[#allocation2 + $0x70] sm:$0xff] %v596
  %629 = vst [vmem:[#allocation2 + $0x78] sm:$0xff] %v597
  %630 = vst [vmem:[#allocation2 + $0x80] sm:$0xff] %v598
  %631 = vst [vmem:[#allocation2 + $0x88] sm:$0xff] %v599
  %632 = vst [vmem:[#allocation2 + $0x90] sm:$0xff] %v600
  %633 = vst [vmem:[#allocation2 + $0x98] sm:$0xff] %v601
  %634 = vst [vmem:[#allocation2 + $0xa0] sm:$0xff] %v602
  %635 = vst [vmem:[#allocation2 + $0xa8] sm:$0xff] %v603
  %636 = vst [vmem:[#allocation2 + $0xb0] sm:$0xff] %v604
  %637 = vst [vmem:[#allocation2 + $0xb8] sm:$0xff] %v605
  %638 = vst [vmem:[#allocation2 + $0xc0] sm:$0xff] %v606
  %639 = vst [vmem:[#allocation2 + $0xc8] sm:$0xff] %v607
  %640 = vst [vmem:[#allocation2 + $0xd0] sm:$0xff] %v608
  %641 = vst [vmem:[#allocation2 + $0xd8] sm:$0xff] %v609
  %642 = vst [vmem:[#allocation2 + $0xe0] sm:$0xff] %v610
  %643 = vst [vmem:[#allocation2 + $0xe8] sm:$0xff] %v611
  %644 = vst [vmem:[#allocation2 + $0xf0] sm:$0xff] %v612
  %645 = vst [vmem:[#allocation2 + $0xf8] sm:$0xff] %v613
  %v646 = vld [vmem:[#allocation2] sm:$0xff]
  %v647 = vld [vmem:[#allocation2 + $0x8] sm:$0xff]
  %v648 = vld [vmem:[#allocation2 + $0x10] sm:$0xff]
  %v649 = vld [vmem:[#allocation2 + $0x18] sm:$0xff]
  %v650 = vld [vmem:[#allocation2 + $0x20] sm:$0xff]
  %v651 = vld [vmem:[#allocation2 + $0x28] sm:$0xff]
  %v652 = vld [vmem:[#allocation2 + $0x30] sm:$0xff]
  %v653 = vld [vmem:[#allocation2 + $0x38] sm:$0xff]
  %v654 = vld [vmem:[#allocation2 + $0x40] sm:$0xff]
  %v655 = vld [vmem:[#allocation2 + $0x48] sm:$0xff]
  %v656 = vld [vmem:[#allocation2 + $0x50] sm:$0xff]
  %v657 = vld [vmem:[#allocation2 + $0x58] sm:$0xff]
  %v658 = vld [vmem:[#allocation2 + $0x60] sm:$0xff]
  %v659 = vld [vmem:[#allocation2 + $0x68] sm:$0xff]
  %v660 = vld [vmem:[#allocation2 + $0x70] sm:$0xff]
  %v661 = vld [vmem:[#allocation2 + $0x78] sm:$0xff]
  %v662 = vld [vmem:[#allocation2 + $0x80] sm:$0xff]
  %v663 = vld [vmem:[#allocation2 + $0x88] sm:$0xff]
  %v664 = vld [vmem:[#allocation2 + $0x90] sm:$0xff]
  %v665 = vld [vmem:[#allocation2 + $0x98] sm:$0xff]
  %v666 = vld [vmem:[#allocation2 + $0xa0] sm:$0xff]
  %v667 = vld [vmem:[#allocation2 + $0xa8] sm:$0xff]
  %v668 = vld [vmem:[#allocation2 + $0xb0] sm:$0xff]
  %v669 = vld [vmem:[#allocation2 + $0xb8] sm:$0xff]
  %v670 = vld [vmem:[#allocation2 + $0xc0] sm:$0xff]
  %v671 = vld [vmem:[#allocation2 + $0xc8] sm:$0xff]
  %v672 = vld [vmem:[#allocation2 + $0xd0] sm:$0xff]
  %v673 = vld [vmem:[#allocation2 + $0xd8] sm:$0xff]
  %v674 = vld [vmem:[#allocation2 + $0xe0] sm:$0xff]
  %v675 = vld [vmem:[#allocation2 + $0xe8] sm:$0xff]
  %v676 = vld [vmem:[#allocation2 + $0xf0] sm:$0xff]
  %v677 = vld [vmem:[#allocation2 + $0xf8] sm:$0xff]
  %v678 = vld [vmem:[%s1] sm:$0xff]
  %v679 = vld [vmem:[%s1 + $0x8] sm:$0xff]
  %v680 = vld [vmem:[%s1 + $0x10] sm:$0xff]
  %v681 = vld [vmem:[%s1 + $0x18] sm:$0xff]
  %v682 = vld [vmem:[%s1 + $0x20] sm:$0xff]
  %v683 = vld [vmem:[%s1 + $0x28] sm:$0xff]
  %v684 = vld [vmem:[%s1 + $0x30] sm:$0xff]
  %v685 = vld [vmem:[%s1 + $0x38] sm:$0xff]
  %v686 = vld [vmem:[%s1 + $0x40] sm:$0xff]
  %v687 = vld [vmem:[%s1 + $0x48] sm:$0xff]
  %v688 = vld [vmem:[%s1 + $0x50] sm:$0xff]
  %v689 = vld [vmem:[%s1 + $0x58] sm:$0xff]
  %v690 = vld [vmem:[%s1 + $0x60] sm:$0xff]
  %v691 = vld [vmem:[%s1 + $0x68] sm:$0xff]
  %v692 = vld [vmem:[%s1 + $0x70] sm:$0xff]
  %v693 = vld [vmem:[%s1 + $0x78] sm:$0xff]
  %v694 = vld [vmem:[%s1 + $0x80] sm:$0xff]
  %v695 = vld [vmem:[%s1 + $0x88] sm:$0xff]
  %v696 = vld [vmem:[%s1 + $0x90] sm:$0xff]
  %v697 = vld [vmem:[%s1 + $0x98] sm:$0xff]
  %v698 = vld [vmem:[%s1 + $0xa0] sm:$0xff]
  %v699 = vld [vmem:[%s1 + $0xa8] sm:$0xff]
  %v700 = vld [vmem:[%s1 + $0xb0] sm:$0xff]
  %v701 = vld [vmem:[%s1 + $0xb8] sm:$0xff]
  %v702 = vld [vmem:[%s1 + $0xc0] sm:$0xff]
  %v703 = vld [vmem:[%s1 + $0xc8] sm:$0xff]
  %v704 = vld [vmem:[%s1 + $0xd0] sm:$0xff]
  %v705 = vld [vmem:[%s1 + $0xd8] sm:$0xff]
  %v706 = vld [vmem:[%s1 + $0xe0] sm:$0xff]
  %v707 = vld [vmem:[%s1 + $0xe8] sm:$0xff]
  %v708 = vld [vmem:[%s1 + $0xf0] sm:$0xff]
  %v709 = vld [vmem:[%s1 + $0xf8] sm:$0xff]
  %v710 = vld [vmem:[%s3] sm:$0xf]
  %v711 = vld [vmem:[%s3 + $0x4] sm:$0xf]
  %v712 = vld [vmem:[%s3 + $0x8] sm:$0xf]
  %v713 = vld [vmem:[%s3 + $0xc] sm:$0xf]
  %v714 = vld [vmem:[%s3 + $0x10] sm:$0xf]
  %v715 = vld [vmem:[%s3 + $0x14] sm:$0xf]
  %v716 = vld [vmem:[%s3 + $0x18] sm:$0xf]
  %v717 = vld [vmem:[%s3 + $0x1c] sm:$0xf]
  %v718 = vld [vmem:[%s3 + $0x20] sm:$0xf]
  %v719 = vld [vmem:[%s3 + $0x24] sm:$0xf]
  %v720 = vld [vmem:[%s3 + $0x28] sm:$0xf]
  %v721 = vld [vmem:[%s3 + $0x2c] sm:$0xf]
  %v722 = vld [vmem:[%s3 + $0x30] sm:$0xf]
  %v723 = vld [vmem:[%s3 + $0x34] sm:$0xf]
  %v724 = vld [vmem:[%s3 + $0x38] sm:$0xf]
  %v725 = vld [vmem:[%s3 + $0x3c] sm:$0xf]
  %v726 = vld [vmem:[%s3 + $0x40] sm:$0xf]
  %v727 = vld [vmem:[%s3 + $0x44] sm:$0xf]
  %v728 = vld [vmem:[%s3 + $0x48] sm:$0xf]
  %v729 = vld [vmem:[%s3 + $0x4c] sm:$0xf]
  %v730 = vld [vmem:[%s3 + $0x50] sm:$0xf]
  %v731 = vld [vmem:[%s3 + $0x54] sm:$0xf]
  %v732 = vld [vmem:[%s3 + $0x58] sm:$0xf]
  %v733 = vld [vmem:[%s3 + $0x5c] sm:$0xf]
  %v734 = vld [vmem:[%s3 + $0x60] sm:$0xf]
  %v735 = vld [vmem:[%s3 + $0x64] sm:$0xf]
  %v736 = vld [vmem:[%s3 + $0x68] sm:$0xf]
  %v737 = vld [vmem:[%s3 + $0x6c] sm:$0xf]
  %v738 = vld [vmem:[%s3 + $0x70] sm:$0xf]
  %v739 = vld [vmem:[%s3 + $0x74] sm:$0xf]
  %v740 = vld [vmem:[%s3 + $0x78] sm:$0xf]
  %v741 = vld [vmem:[%s3 + $0x7c] sm:$0xf]
  %v774 = vunpack.c.l.b16 %v678
  %v775 = vunpack.c.h.b16 %v678
  %v776 = vunpack.c.l.b16 %v679
  %v777 = vunpack.c.h.b16 %v679
  %v778 = vunpack.c.l.b16 %v680
  %v779 = vunpack.c.h.b16 %v680
  %v780 = vunpack.c.l.b16 %v681
  %v781 = vunpack.c.h.b16 %v681
  %v782 = vunpack.c.l.b16 %v682
  %v783 = vunpack.c.h.b16 %v682
  %v784 = vunpack.c.l.b16 %v683
  %v785 = vunpack.c.h.b16 %v683
  %v786 = vunpack.c.l.b16 %v684
  %v787 = vunpack.c.h.b16 %v684
  %v788 = vunpack.c.l.b16 %v685
  %v789 = vunpack.c.h.b16 %v685
  %v790 = vunpack.c.l.b16 %v686
  %v791 = vunpack.c.h.b16 %v686
  %v792 = vunpack.c.l.b16 %v687
  %v793 = vunpack.c.h.b16 %v687
  %v794 = vunpack.c.l.b16 %v688
  %v795 = vunpack.c.h.b16 %v688
  %v796 = vunpack.c.l.b16 %v689
  %v797 = vunpack.c.h.b16 %v689
  %v798 = vunpack.c.l.b16 %v690
  %v799 = vunpack.c.h.b16 %v690
  %v800 = vunpack.c.l.b16 %v691
  %v801 = vunpack.c.h.b16 %v691
  %v802 = vunpack.c.l.b16 %v692
  %v803 = vunpack.c.h.b16 %v692
  %v804 = vunpack.c.l.b16 %v693
  %v805 = vunpack.c.h.b16 %v693
  %v806 = vunpack.c.l.b16 %v694
  %v807 = vunpack.c.h.b16 %v694
  %v808 = vunpack.c.l.b16 %v695
  %v809 = vunpack.c.h.b16 %v695
  %v810 = vunpack.c.l.b16 %v696
  %v811 = vunpack.c.h.b16 %v696
  %v812 = vunpack.c.l.b16 %v697
  %v813 = vunpack.c.h.b16 %v697
  %v814 = vunpack.c.l.b16 %v698
  %v815 = vunpack.c.h.b16 %v698
  %v816 = vunpack.c.l.b16 %v699
  %v817 = vunpack.c.h.b16 %v699
  %v818 = vunpack.c.l.b16 %v700
  %v819 = vunpack.c.h.b16 %v700
  %v820 = vunpack.c.l.b16 %v701
  %v821 = vunpack.c.h.b16 %v701
  %v822 = vunpack.c.l.b16 %v702
  %v823 = vunpack.c.h.b16 %v702
  %v824 = vunpack.c.l.b16 %v703
  %v825 = vunpack.c.h.b16 %v703
  %v826 = vunpack.c.l.b16 %v704
  %v827 = vunpack.c.h.b16 %v704
  %v828 = vunpack.c.l.b16 %v705
  %v829 = vunpack.c.h.b16 %v705
  %v830 = vunpack.c.l.b16 %v706
  %v831 = vunpack.c.h.b16 %v706
  %v832 = vunpack.c.l.b16 %v707
  %v833 = vunpack.c.h.b16 %v707
  %v834 = vunpack.c.l.b16 %v708
  %v835 = vunpack.c.h.b16 %v708
  %v836 = vunpack.c.l.b16 %v709
  %v837 = vunpack.c.h.b16 %v709
  %v838 = vpack.c.b16 %v776, %v774
  %v839 = vpack.c.b16 %v777, %v775
  %v840 = vpack.c.b16 %v780, %v778
  %v841 = vpack.c.b16 %v781, %v779
  %v842 = vpack.c.b16 %v784, %v782
  %v843 = vpack.c.b16 %v785, %v783
  %v844 = vpack.c.b16 %v788, %v786
  %v845 = vpack.c.b16 %v789, %v787
  %v846 = vpack.c.b16 %v792, %v790
  %v847 = vpack.c.b16 %v793, %v791
  %v848 = vpack.c.b16 %v796, %v794
  %v849 = vpack.c.b16 %v797, %v795
  %v850 = vpack.c.b16 %v800, %v798
  %v851 = vpack.c.b16 %v801, %v799
  %v852 = vpack.c.b16 %v804, %v802
  %v853 = vpack.c.b16 %v805, %v803
  %v854 = vpack.c.b16 %v808, %v806
  %v855 = vpack.c.b16 %v809, %v807
  %v856 = vpack.c.b16 %v812, %v810
  %v857 = vpack.c.b16 %v813, %v811
  %v858 = vpack.c.b16 %v816, %v814
  %v859 = vpack.c.b16 %v817, %v815
  %v860 = vpack.c.b16 %v820, %v818
  %v861 = vpack.c.b16 %v821, %v819
  %v862 = vpack.c.b16 %v824, %v822
  %v863 = vpack.c.b16 %v825, %v823
  %v864 = vpack.c.b16 %v828, %v826
  %v865 = vpack.c.b16 %v829, %v827
  %v866 = vpack.c.b16 %v832, %v830
  %v867 = vpack.c.b16 %v833, %v831
  %v868 = vpack.c.b16 %v836, %v834
  %v869 = vpack.c.b16 %v837, %v835
  %v934 = vunpack.c.l.b16 %v710
  %v935 = vunpack.c.l.b16 %v711
  %v936 = vunpack.c.l.b16 %v712
  %v937 = vunpack.c.l.b16 %v713
  %v938 = vunpack.c.l.b16 %v714
  %v939 = vunpack.c.l.b16 %v715
  %v940 = vunpack.c.l.b16 %v716
  %v941 = vunpack.c.l.b16 %v717
  %v942 = vunpack.c.l.b16 %v718
  %v943 = vunpack.c.l.b16 %v719
  %v944 = vunpack.c.l.b16 %v720
  %v945 = vunpack.c.l.b16 %v721
  %v946 = vunpack.c.l.b16 %v722
  %v947 = vunpack.c.l.b16 %v723
  %v948 = vunpack.c.l.b16 %v724
  %v949 = vunpack.c.l.b16 %v725
  %v950 = vunpack.c.l.b16 %v726
  %v951 = vunpack.c.l.b16 %v727
  %v952 = vunpack.c.l.b16 %v728
  %v953 = vunpack.c.l.b16 %v729
  %v954 = vunpack.c.l.b16 %v730
  %v955 = vunpack.c.l.b16 %v731
  %v956 = vunpack.c.l.b16 %v732
  %v957 = vunpack.c.l.b16 %v733
  %v958 = vunpack.c.l.b16 %v734
  %v959 = vunpack.c.l.b16 %v735
  %v960 = vunpack.c.l.b16 %v736
  %v961 = vunpack.c.l.b16 %v737
  %v962 = vunpack.c.l.b16 %v738
  %v963 = vunpack.c.l.b16 %v739
  %v964 = vunpack.c.l.b16 %v740
  %v965 = vunpack.c.l.b16 %v741
  %v966 = vpack.c.b16 %v935, %v934
  %v967 = vpack.c.b16 %v937, %v936
  %v968 = vpack.c.b16 %v939, %v938
  %v969 = vpack.c.b16 %v941, %v940
  %v970 = vpack.c.b16 %v943, %v942
  %v971 = vpack.c.b16 %v945, %v944
  %v972 = vpack.c.b16 %v947, %v946
  %v973 = vpack.c.b16 %v949, %v948
  %v974 = vpack.c.b16 %v951, %v950
  %v975 = vpack.c.b16 %v953, %v952
  %v976 = vpack.c.b16 %v955, %v954
  %v977 = vpack.c.b16 %v957, %v956
  %v978 = vpack.c.b16 %v959, %v958
  %v979 = vpack.c.b16 %v961, %v960
  %v980 = vpack.c.b16 %v963, %v962
  %v981 = vpack.c.b16 %v965, %v964
  %998 = vmatprep.subr.bf16.mxu0 0
  %999 = vmatpush1.bf16.msra.mxu0 %v966
  %1000 = vmatprep.subr.bf16.mxu0 0
  %1001 = vmatpush1.bf16.msra.mxu0 %v967
  %1002 = vmatprep.subr.bf16.mxu0 0
  %1003 = vmatpush1.bf16.msra.mxu0 %v968
  %1004 = vmatprep.subr.bf16.mxu0 0
  %1005 = vmatpush1.bf16.msra.mxu0 %v969
  %1006 = vmatprep.subr.bf16.mxu0 0
  %1007 = vmatpush1.bf16.msra.mxu0 %v970
  %1008 = vmatprep.subr.bf16.mxu0 0
  %1009 = vmatpush1.bf16.msra.mxu0 %v971
  %1010 = vmatprep.subr.bf16.mxu0 0
  %1011 = vmatpush1.bf16.msra.mxu0 %v972
  %1012 = vmatprep.subr.bf16.mxu0 0
  %1013 = vmatpush1.bf16.msra.mxu0 %v973
  %1014 = vmatprep.subr.bf16.mxu0 0
  %1015 = vmatpush1.bf16.msra.mxu0 %v974
  %1016 = vmatprep.subr.bf16.mxu0 0
  %1017 = vmatpush1.bf16.msra.mxu0 %v975
  %1018 = vmatprep.subr.bf16.mxu0 0
  %1019 = vmatpush1.bf16.msra.mxu0 %v976
  %1020 = vmatprep.subr.bf16.mxu0 0
  %1021 = vmatpush1.bf16.msra.mxu0 %v977
  %1022 = vmatprep.subr.bf16.mxu0 0
  %1023 = vmatpush1.bf16.msra.mxu0 %v978
  %1024 = vmatprep.subr.bf16.mxu0 0
  %1025 = vmatpush1.bf16.msra.mxu0 %v979
  %1026 = vmatprep.subr.bf16.mxu0 0
  %1027 = vmatpush1.bf16.msra.mxu0 %v980
  %1028 = vmatprep.subr.bf16.mxu0 0
  %1029 = vmatpush1.bf16.msra.mxu0 %v981
  %1030 = vmatprep.mubr.bf16.mxu0 %v839
  %1031 = vmatmul.mubr.bf16.gmra.mrb[0].mxu0 %v838
  %v1032 = vpop.f32.mrb[0].mxu0
  %v1033 = vadd.f32 0.0, %v1032
  %v1034 = vpop.f32.mrb[0].mxu0
  %v1035 = vpop.f32.mrb[0].mxu0
  %v1036 = vadd.f32 0.0, %v1035
  %v1037 = vpop.f32.mrb[0].mxu0
  %1038 = vmatprep.mubr.bf16.mxu0 %v841
  %1039 = vmatmul.mubr.bf16.gmra.mrb[0].mxu0 %v840
  %v1040 = vpop.f32.mrb[0].mxu0
  %v1041 = vadd.f32 0.0, %v1040
  %v1042 = vpop.f32.mrb[0].mxu0
  %v1043 = vpop.f32.mrb[0].mxu0
  %v1044 = vadd.f32 0.0, %v1043
  %v1045 = vpop.f32.mrb[0].mxu0
  %1046 = vmatprep.mubr.bf16.mxu0 %v843
  %1047 = vmatmul.mubr.bf16.gmra.mrb[0].mxu0 %v842
  %v1048 = vpop.f32.mrb[0].mxu0
  %v1049 = vadd.f32 0.0, %v1048
  %v1050 = vpop.f32.mrb[0].mxu0
  %v1051 = vpop.f32.mrb[0].mxu0
  %v1052 = vadd.f32 0.0, %v1051
  %v1053 = vpop.f32.mrb[0].mxu0
  %1054 = vmatprep.mubr.bf16.mxu0 %v845
  %1055 = vmatmul.mubr.bf16.gmra.mrb[0].mxu0 %v844
  %v1056 = vpop.f32.mrb[0].mxu0
  %v1057 = vadd.f32 0.0, %v1056
  %v1058 = vpop.f32.mrb[0].mxu0
  %v1059 = vpop.f32.mrb[0].mxu0
  %v1060 = vadd.f32 0.0, %v1059
  %v1061 = vpop.f32.mrb[0].mxu0
  %1062 = vmatprep.mubr.bf16.mxu0 %v847
  %1063 = vmatmul.mubr.bf16.gmra.mrb[0].mxu0 %v846
  %v1064 = vpop.f32.mrb[0].mxu0
  %v1065 = vadd.f32 0.0, %v1064
  %v1066 = vpop.f32.mrb[0].mxu0
  %v1067 = vpop.f32.mrb[0].mxu0
  %v1068 = vadd.f32 0.0, %v1067
  %v1069 = vpop.f32.mrb[0].mxu0
  %1070 = vmatprep.mubr.bf16.mxu0 %v849
  %1071 = vmatmul.mubr.bf16.gmra.mrb[0].mxu0 %v848
  %v1072 = vpop.f32.mrb[0].mxu0
  %v1073 = vadd.f32 0.0, %v1072
  %v1074 = vpop.f32.mrb[0].mxu0
  %v1075 = vpop.f32.mrb[0].mxu0
  %v1076 = vadd.f32 0.0, %v1075
  %v1077 = vpop.f32.mrb[0].mxu0
  %1078 = vmatprep.mubr.bf16.mxu0 %v851
  %1079 = vmatmul.mubr.bf16.gmra.mrb[0].mxu0 %v850
  %v1080 = vpop.f32.mrb[0].mxu0
  %v1081 = vadd.f32 0.0, %v1080
  %v1082 = vpop.f32.mrb[0].mxu0
  %v1083 = vpop.f32.mrb[0].mxu0
  %v1084 = vadd.f32 0.0, %v1083
  %v1085 = vpop.f32.mrb[0].mxu0
  %1086 = vmatprep.mubr.bf16.mxu0 %v853
  %1087 = vmatmul.mubr.bf16.gmra.mrb[0].mxu0 %v852
  %v1088 = vpop.f32.mrb[0].mxu0
  %v1089 = vadd.f32 0.0, %v1088
  %v1090 = vpop.f32.mrb[0].mxu0
  %v1091 = vpop.f32.mrb[0].mxu0
  %v1092 = vadd.f32 0.0, %v1091
  %v1093 = vpop.f32.mrb[0].mxu0
  %1094 = vmatprep.mubr.bf16.mxu0 %v855
  %1095 = vmatmul.mubr.bf16.gmra.mrb[0].mxu0 %v854
  %v1096 = vpop.f32.mrb[0].mxu0
  %v1097 = vadd.f32 0.0, %v1096
  %v1098 = vpop.f32.mrb[0].mxu0
  %v1099 = vpop.f32.mrb[0].mxu0
  %v1100 = vadd.f32 0.0, %v1099
  %v1101 = vpop.f32.mrb[0].mxu0
  %1102 = vmatprep.mubr.bf16.mxu0 %v857
  %1103 = vmatmul.mubr.bf16.gmra.mrb[0].mxu0 %v856
  %v1104 = vpop.f32.mrb[0].mxu0
  %v1105 = vadd.f32 0.0, %v1104
  %v1106 = vpop.f32.mrb[0].mxu0
  %v1107 = vpop.f32.mrb[0].mxu0
  %v1108 = vadd.f32 0.0, %v1107
  %v1109 = vpop.f32.mrb[0].mxu0
  %1110 = vmatprep.mubr.bf16.mxu0 %v859
  %1111 = vmatmul.mubr.bf16.gmra.mrb[0].mxu0 %v858
  %v1112 = vpop.f32.mrb[0].mxu0
  %v1113 = vadd.f32 0.0, %v1112
  %v1114 = vpop.f32.mrb[0].mxu0
  %v1115 = vpop.f32.mrb[0].mxu0
  %v1116 = vadd.f32 0.0, %v1115
  %v1117 = vpop.f32.mrb[0].mxu0
  %1118 = vmatprep.mubr.bf16.mxu0 %v861
  %1119 = vmatmul.mubr.bf16.gmra.mrb[0].mxu0 %v860
  %v1120 = vpop.f32.mrb[0].mxu0
  %v1121 = vadd.f32 0.0, %v1120
  %v1122 = vpop.f32.mrb[0].mxu0
  %v1123 = vpop.f32.mrb[0].mxu0
  %v1124 = vadd.f32 0.0, %v1123
  %v1125 = vpop.f32.mrb[0].mxu0
  %1126 = vmatprep.mubr.bf16.mxu0 %v863
  %1127 = vmatmul.mubr.bf16.gmra.mrb[0].mxu0 %v862
  %v1128 = vpop.f32.mrb[0].mxu0
  %v1129 = vadd.f32 0.0, %v1128
  %v1130 = vpop.f32.mrb[0].mxu0
  %v1131 = vpop.f32.mrb[0].mxu0
  %v1132 = vadd.f32 0.0, %v1131
  %v1133 = vpop.f32.mrb[0].mxu0
  %1134 = vmatprep.mubr.bf16.mxu0 %v865
  %1135 = vmatmul.mubr.bf16.gmra.mrb[0].mxu0 %v864
  %v1136 = vpop.f32.mrb[0].mxu0
  %v1137 = vadd.f32 0.0, %v1136
  %v1138 = vpop.f32.mrb[0].mxu0
  %v1139 = vpop.f32.mrb[0].mxu0
  %v1140 = vadd.f32 0.0, %v1139
  %v1141 = vpop.f32.mrb[0].mxu0
  %1142 = vmatprep.mubr.bf16.mxu0 %v867
  %1143 = vmatmul.mubr.bf16.gmra.mrb[0].mxu0 %v866
  %v1144 = vpop.f32.mrb[0].mxu0
  %v1145 = vadd.f32 0.0, %v1144
  %v1146 = vpop.f32.mrb[0].mxu0
  %v1147 = vpop.f32.mrb[0].mxu0
  %v1148 = vadd.f32 0.0, %v1147
  %v1149 = vpop.f32.mrb[0].mxu0
  %1150 = vmatprep.mubr.bf16.mxu0 %v869
  %1151 = vmatmul.mubr.bf16.gmra.mrb[0].mxu0 %v868
  %v1152 = vpop.f32.mrb[0].mxu0
  %v1153 = vadd.f32 0.0, %v1152
  %v1154 = vpop.f32.mrb[0].mxu0
  %v1155 = vpop.f32.mrb[0].mxu0
  %v1156 = vadd.f32 0.0, %v1155
  %v1157 = vpop.f32.mrb[0].mxu0
  %1158 = vdwg.mxu0
  %v1159 = vadd.f32 %v646, %v1033
  %v1160 = vadd.f32 %v647, %v1036
  %v1161 = vadd.f32 %v648, %v1041
  %v1162 = vadd.f32 %v649, %v1044
  %v1163 = vadd.f32 %v650, %v1049
  %v1164 = vadd.f32 %v651, %v1052
  %v1165 = vadd.f32 %v652, %v1057
  %v1166 = vadd.f32 %v653, %v1060
  %v1167 = vadd.f32 %v654, %v1065
  %v1168 = vadd.f32 %v655, %v1068
  %v1169 = vadd.f32 %v656, %v1073
  %v1170 = vadd.f32 %v657, %v1076
  %v1171 = vadd.f32 %v658, %v1081
  %v1172 = vadd.f32 %v659, %v1084
  %v1173 = vadd.f32 %v660, %v1089
  %v1174 = vadd.f32 %v661, %v1092
  %v1175 = vadd.f32 %v662, %v1097
  %v1176 = vadd.f32 %v663, %v1100
  %v1177 = vadd.f32 %v664, %v1105
  %v1178 = vadd.f32 %v665, %v1108
  %v1179 = vadd.f32 %v666, %v1113
  %v1180 = vadd.f32 %v667, %v1116
  %v1181 = vadd.f32 %v668, %v1121
  %v1182 = vadd.f32 %v669, %v1124
  %v1183 = vadd.f32 %v670, %v1129
  %v1184 = vadd.f32 %v671, %v1132
  %v1185 = vadd.f32 %v672, %v1137
  %v1186 = vadd.f32 %v673, %v1140
  %v1187 = vadd.f32 %v674, %v1145
  %v1188 = vadd.f32 %v675, %v1148
  %v1189 = vadd.f32 %v676, %v1153
  %v1190 = vadd.f32 %v677, %v1156
  %1191 = vst [vmem:[#allocation2] sm:$0xff] %v1159
  %1192 = vst [vmem:[#allocation2 + $0x8] sm:$0xff] %v1160
  %1193 = vst [vmem:[#allocation2 + $0x10] sm:$0xff] %v1161
  %1194 = vst [vmem:[#allocation2 + $0x18] sm:$0xff] %v1162
  %1195 = vst [vmem:[#allocation2 + $0x20] sm:$0xff] %v1163
  %1196 = vst [vmem:[#allocation2 + $0x28] sm:$0xff] %v1164
  %1197 = vst [vmem:[#allocation2 + $0x30] sm:$0xff] %v1165
  %1198 = vst [vmem:[#allocation2 + $0x38] sm:$0xff] %v1166
  %1199 = vst [vmem:[#allocation2 + $0x40] sm:$0xff] %v1167
  %1200 = vst [vmem:[#allocation2 + $0x48] sm:$0xff] %v1168
  %1201 = vst [vmem:[#allocation2 + $0x50] sm:$0xff] %v1169
  %1202 = vst [vmem:[#allocation2 + $0x58] sm:$0xff] %v1170
  %1203 = vst [vmem:[#allocation2 + $0x60] sm:$0xff] %v1171
  %1204 = vst [vmem:[#allocation2 + $0x68] sm:$0xff] %v1172
  %1205 = vst [vmem:[#allocation2 + $0x70] sm:$0xff] %v1173
  %1206 = vst [vmem:[#allocation2 + $0x78] sm:$0xff] %v1174
  %1207 = vst [vmem:[#allocation2 + $0x80] sm:$0xff] %v1175
  %1208 = vst [vmem:[#allocation2 + $0x88] sm:$0xff] %v1176
  %1209 = vst [vmem:[#allocation2 + $0x90] sm:$0xff] %v1177
  %1210 = vst [vmem:[#allocation2 + $0x98] sm:$0xff] %v1178
  %1211 = vst [vmem:[#allocation2 + $0xa0] sm:$0xff] %v1179
  %1212 = vst [vmem:[#allocation2 + $0xa8] sm:$0xff] %v1180
  %1213 = vst [vmem:[#allocation2 + $0xb0] sm:$0xff] %v1181
  %1214 = vst [vmem:[#allocation2 + $0xb8] sm:$0xff] %v1182
  %1215 = vst [vmem:[#allocation2 + $0xc0] sm:$0xff] %v1183
  %1216 = vst [vmem:[#allocation2 + $0xc8] sm:$0xff] %v1184
  %1217 = vst [vmem:[#allocation2 + $0xd0] sm:$0xff] %v1185
  %1218 = vst [vmem:[#allocation2 + $0xd8] sm:$0xff] %v1186
  %1219 = vst [vmem:[#allocation2 + $0xe0] sm:$0xff] %v1187
  %1220 = vst [vmem:[#allocation2 + $0xe8] sm:$0xff] %v1188
  %1221 = vst [vmem:[#allocation2 + $0xf0] sm:$0xff] %v1189
  %1222 = vst [vmem:[#allocation2 + $0xf8] sm:$0xff] %v1190
  // Predicated region
  $region42: #{bilateral_roi_heads.1} parent=0 // pred_check
    %p1223 = pneg %p33
  $region43: #{bilateral_roi_heads.1} parent=0 // pred_check_branch
    %1225 = sbr.rel (%p1223) target = $region45
  $region44: #{bilateral_roi_heads.1} parent=0 // pred_region
    %v1226 = vld [vmem:[#allocation2] sm:$0xff]
    %v1227 = vld [vmem:[#allocation2 + $0x8] sm:$0xff]
    %v1228 = vld [vmem:[#allocation2 + $0x10] sm:$0xff]
    %v1229 = vld [vmem:[#allocation2 + $0x18] sm:$0xff]
    %v1230 = vld [vmem:[#allocation2 + $0x20] sm:$0xff]
    %v1231 = vld [vmem:[#allocation2 + $0x28] sm:$0xff]
    %v1232 = vld [vmem:[#allocation2 + $0x30] sm:$0xff]
    %v1233 = vld [vmem:[#allocation2 + $0x38] sm:$0xff]
    %v1234 = vld [vmem:[#allocation2 + $0x40] sm:$0xff]
    %v1235 = vld [vmem:[#allocation2 + $0x48] sm:$0xff]
    %v1236 = vld [vmem:[#allocation2 + $0x50] sm:$0xff]
    %v1237 = vld [vmem:[#allocation2 + $0x58] sm:$0xff]
    %v1238 = vld [vmem:[#allocation2 + $0x60] sm:$0xff]
    %v1239 = vld [vmem:[#allocation2 + $0x68] sm:$0xff]
    %v1240 = vld [vmem:[#allocation2 + $0x70] sm:$0xff]
    %v1241 = vld [vmem:[#allocation2 + $0x78] sm:$0xff]
    %v1242 = vld [vmem:[#allocation2 + $0x80] sm:$0xff]
    %v1243 = vld [vmem:[#allocation2 + $0x88] sm:$0xff]
    %v1244 = vld [vmem:[#allocation2 + $0x90] sm:$0xff]
    %v1245 = vld [vmem:[#allocation2 + $0x98] sm:$0xff]
    %v1246 = vld [vmem:[#allocation2 + $0xa0] sm:$0xff]
    %v1247 = vld [vmem:[#allocation2 + $0xa8] sm:$0xff]
    %v1248 = vld [vmem:[#allocation2 + $0xb0] sm:$0xff]
    %v1249 = vld [vmem:[#allocation2 + $0xb8] sm:$0xff]
    %v1250 = vld [vmem:[#allocation2 + $0xc0] sm:$0xff]
    %v1251 = vld [vmem:[#allocation2 + $0xc8] sm:$0xff]
    %v1252 = vld [vmem:[#allocation2 + $0xd0] sm:$0xff]
    %v1253 = vld [vmem:[#allocation2 + $0xd8] sm:$0xff]
    %v1254 = vld [vmem:[#allocation2 + $0xe0] sm:$0xff]
    %v1255 = vld [vmem:[#allocation2 + $0xe8] sm:$0xff]
    %v1256 = vld [vmem:[#allocation2 + $0xf0] sm:$0xff]
    %v1257 = vld [vmem:[#allocation2 + $0xf8] sm:$0xff]
    %v1258 = vld [vmem:[%s4] sm:$0x1]
    %v1260 = vlaneseq
    %v1261 = vshrl.u32 %v1260, 7
    %v1262 = vsub.s32 0, %v1261
    %v1263 = vrot.slane %v1258, %v1262
    %v1265 = vadd.f32 %v1226, %v1263
    %v1266 = vadd.f32 %v1227, %v1263
    %v1267 = vadd.f32 %v1228, %v1263
    %v1268 = vadd.f32 %v1229, %v1263
    %v1269 = vadd.f32 %v1230, %v1263
    %v1270 = vadd.f32 %v1231, %v1263
    %v1271 = vadd.f32 %v1232, %v1263
    %v1272 = vadd.f32 %v1233, %v1263
    %v1273 = vadd.f32 %v1234, %v1263
    %v1274 = vadd.f32 %v1235, %v1263
    %v1275 = vadd.f32 %v1236, %v1263
    %v1276 = vadd.f32 %v1237, %v1263
    %v1277 = vadd.f32 %v1238, %v1263
    %v1278 = vadd.f32 %v1239, %v1263
    %v1279 = vadd.f32 %v1240, %v1263
    %v1280 = vadd.f32 %v1241, %v1263
    %v1281 = vadd.f32 %v1242, %v1263
    %v1282 = vadd.f32 %v1243, %v1263
    %v1283 = vadd.f32 %v1244, %v1263
    %v1284 = vadd.f32 %v1245, %v1263
    %v1285 = vadd.f32 %v1246, %v1263
    %v1286 = vadd.f32 %v1247, %v1263
    %v1287 = vadd.f32 %v1248, %v1263
    %v1288 = vadd.f32 %v1249, %v1263
    %v1289 = vadd.f32 %v1250, %v1263
    %v1290 = vadd.f32 %v1251, %v1263
    %v1291 = vadd.f32 %v1252, %v1263
    %v1292 = vadd.f32 %v1253, %v1263
    %v1293 = vadd.f32 %v1254, %v1263
    %v1294 = vadd.f32 %v1255, %v1263
    %v1295 = vadd.f32 %v1256, %v1263
    %v1296 = vadd.f32 %v1257, %v1263
    %v1297 = vmax.f32 %v1265, 0.0
    %v1298 = vmax.f32 %v1266, 0.0
    %v1299 = vmax.f32 %v1267, 0.0
    %v1300 = vmax.f32 %v1268, 0.0
    %v1301 = vmax.f32 %v1269, 0.0
    %v1302 = vmax.f32 %v1270, 0.0
    %v1303 = vmax.f32 %v1271, 0.0
    %v1304 = vmax.f32 %v1272, 0.0
    %v1305 = vmax.f32 %v1273, 0.0
    %v1306 = vmax.f32 %v1274, 0.0
    %v1307 = vmax.f32 %v1275, 0.0
    %v1308 = vmax.f32 %v1276, 0.0
    %v1309 = vmax.f32 %v1277, 0.0
    %v1310 = vmax.f32 %v1278, 0.0
    %v1311 = vmax.f32 %v1279, 0.0
    %v1312 = vmax.f32 %v1280, 0.0
    %v1313 = vmax.f32 %v1281, 0.0
    %v1314 = vmax.f32 %v1282, 0.0
    %v1315 = vmax.f32 %v1283, 0.0
    %v1316 = vmax.f32 %v1284, 0.0
    %v1317 = vmax.f32 %v1285, 0.0
    %v1318 = vmax.f32 %v1286, 0.0
    %v1319 = vmax.f32 %v1287, 0.0
    %v1320 = vmax.f32 %v1288, 0.0
    %v1321 = vmax.f32 %v1289, 0.0
    %v1322 = vmax.f32 %v1290, 0.0
    %v1323 = vmax.f32 %v1291, 0.0
    %v1324 = vmax.f32 %v1292, 0.0
    %v1325 = vmax.f32 %v1293, 0.0
    %v1326 = vmax.f32 %v1294, 0.0
    %v1327 = vmax.f32 %v1295, 0.0
    %v1328 = vmax.f32 %v1296, 0.0
    %v1329 = vpack.c.bf16 %v1298, %v1297
    %v1330 = vpack.c.bf16 %v1300, %v1299
    %v1331 = vpack.c.bf16 %v1302, %v1301
    %v1332 = vpack.c.bf16 %v1304, %v1303
    %v1333 = vpack.c.bf16 %v1306, %v1305
    %v1334 = vpack.c.bf16 %v1308, %v1307
    %v1335 = vpack.c.bf16 %v1310, %v1309
    %v1336 = vpack.c.bf16 %v1312, %v1311
    %v1337 = vpack.c.bf16 %v1314, %v1313
    %v1338 = vpack.c.bf16 %v1316, %v1315
    %v1339 = vpack.c.bf16 %v1318, %v1317
    %v1340 = vpack.c.bf16 %v1320, %v1319
    %v1341 = vpack.c.bf16 %v1322, %v1321
    %v1342 = vpack.c.bf16 %v1324, %v1323
    %v1343 = vpack.c.bf16 %v1326, %v1325
    %v1344 = vpack.c.bf16 %v1328, %v1327
    %v1345 = vld [vmem:[%s5] sm:$0xf]
    %v1346 = vld [vmem:[%s5 + $0x4] sm:$0xf]
    %v1347 = vld [vmem:[%s5 + $0x8] sm:$0xf]
    %v1348 = vld [vmem:[%s5 + $0xc] sm:$0xf]
    %v1349 = vld [vmem:[%s5 + $0x10] sm:$0xf]
    %v1350 = vld [vmem:[%s5 + $0x14] sm:$0xf]
    %v1351 = vld [vmem:[%s5 + $0x18] sm:$0xf]
    %v1352 = vld [vmem:[%s5 + $0x1c] sm:$0xf]
    %v1353 = vld [vmem:[%s5 + $0x20] sm:$0xf]
    %v1354 = vld [vmem:[%s5 + $0x24] sm:$0xf]
    %v1355 = vld [vmem:[%s5 + $0x28] sm:$0xf]
    %v1356 = vld [vmem:[%s5 + $0x2c] sm:$0xf]
    %v1357 = vld [vmem:[%s5 + $0x30] sm:$0xf]
    %v1358 = vld [vmem:[%s5 + $0x34] sm:$0xf]
    %v1359 = vld [vmem:[%s5 + $0x38] sm:$0xf]
    %v1360 = vld [vmem:[%s5 + $0x3c] sm:$0xf]
    %v1361 = vld [vmem:[%s6] sm:$0x1]
    %v1363 = vlaneseq
    %v1364 = vshrl.u32 %v1363, 7
    %v1365 = vsub.s32 0, %v1364
    %v1366 = vrot.slane %v1361, %v1365
    %v1384 = vunpack.c.l.b16 %v1345
    %v1385 = vunpack.c.l.b16 %v1346
    %v1386 = vunpack.c.l.b16 %v1347
    %v1387 = vunpack.c.l.b16 %v1348
    %v1388 = vunpack.c.l.b16 %v1349
    %v1389 = vunpack.c.l.b16 %v1350
    %v1390 = vunpack.c.l.b16 %v1351
    %v1391 = vunpack.c.l.b16 %v1352
    %v1392 = vunpack.c.l.b16 %v1353
    %v1393 = vunpack.c.l.b16 %v1354
    %v1394 = vunpack.c.l.b16 %v1355
    %v1395 = vunpack.c.l.b16 %v1356
    %v1396 = vunpack.c.l.b16 %v1357
    %v1397 = vunpack.c.l.b16 %v1358
    %v1398 = vunpack.c.l.b16 %v1359
    %v1399 = vunpack.c.l.b16 %v1360
    %v1400 = vpack.c.b16 %v1385, %v1384
    %v1401 = vpack.c.b16 %v1387, %v1386
    %v1402 = vpack.c.b16 %v1389, %v1388
    %v1403 = vpack.c.b16 %v1391, %v1390
    %v1404 = vpack.c.b16 %v1393, %v1392
    %v1405 = vpack.c.b16 %v1395, %v1394
    %v1406 = vpack.c.b16 %v1397, %v1396
    %v1407 = vpack.c.b16 %v1399, %v1398
    %1416 = vmatprep.subr.bf16.mxu0 0
    %1417 = vmatpush1.bf16.msra.mxu0 %v1400
    %1418 = vmatprep.subr.bf16.mxu0 0
    %1419 = vmatpush1.bf16.msra.mxu0 %v1401
    %1420 = vmatprep.subr.bf16.mxu0 0
    %1421 = vmatpush1.bf16.msra.mxu0 %v1402
    %1422 = vmatprep.subr.bf16.mxu0 0
    %1423 = vmatpush1.bf16.msra.mxu0 %v1403
    %1424 = vmatprep.subr.bf16.mxu0 0
    %1425 = vmatpush1.bf16.msra.mxu0 %v1404
    %1426 = vmatprep.subr.bf16.mxu0 0
    %1427 = vmatpush1.bf16.msra.mxu0 %v1405
    %1428 = vmatprep.subr.bf16.mxu0 0
    %1429 = vmatpush1.bf16.msra.mxu0 %v1406
    %1430 = vmatprep.subr.bf16.mxu0 0
    %1431 = vmatpush1.bf16.msra.mxu0 %v1407
    %1432 = vmatprep.subr.bf16.mxu0 0
    %1433 = vmatpush1.bf16.msra.mxu0 0
    %1434 = vmatprep.subr.bf16.mxu0 0
    %1435 = vmatpush1.bf16.msra.mxu0 0
    %1436 = vmatprep.subr.bf16.mxu0 0
    %1437 = vmatpush1.bf16.msra.mxu0 0
    %1438 = vmatprep.subr.bf16.mxu0 0
    %1439 = vmatpush1.bf16.msra.mxu0 0
    %1440 = vmatprep.subr.bf16.mxu0 0
    %1441 = vmatpush1.bf16.msra.mxu0 0
    %1442 = vmatprep.subr.bf16.mxu0 0
    %1443 = vmatpush1.bf16.msra.mxu0 0
    %1444 = vmatprep.subr.bf16.mxu0 0
    %1445 = vmatpush1.bf16.msra.mxu0 0
    %1446 = vmatprep.subr.bf16.mxu0 0
    %1447 = vmatpush1.bf16.msra.mxu0 0
    %1448 = vmatprep.mubr.bf16.mxu0 0
    %1449 = vmatmul.mubr.bf16.gmra.mrb[0].mxu0 %v1329
    %v1450 = vpop.f32.mrb[0].mxu0
    %v1451 = vadd.f32 %v1366, %v1450
    %v1452 = vpop.f32.mrb[0].mxu0
    %v1453 = vpop.f32.mrb[0].mxu0
    %v1454 = vadd.f32 %v1366, %v1453
    %v1455 = vpop.f32.mrb[0].mxu0
    %1456 = vmatprep.mubr.bf16.mxu0 0
    %1457 = vmatmul.mubr.bf16.gmra.mrb[0].mxu0 %v1330
    %v1458 = vpop.f32.mrb[0].mxu0
    %v1459 = vadd.f32 %v1366, %v1458
    %v1460 = vpop.f32.mrb[0].mxu0
    %v1461 = vpop.f32.mrb[0].mxu0
    %v1462 = vadd.f32 %v1366, %v1461
    %v1463 = vpop.f32.mrb[0].mxu0
    %1464 = vmatprep.mubr.bf16.mxu0 0
    %1465 = vmatmul.mubr.bf16.gmra.mrb[0].mxu0 %v1331
    %v1466 = vpop.f32.mrb[0].mxu0
    %v1467 = vadd.f32 %v1366, %v1466
    %v1468 = vpop.f32.mrb[0].mxu0
    %v1469 = vpop.f32.mrb[0].mxu0
    %v1470 = vadd.f32 %v1366, %v1469
    %v1471 = vpop.f32.mrb[0].mxu0
    %1472 = vmatprep.mubr.bf16.mxu0 0
    %1473 = vmatmul.mubr.bf16.gmra.mrb[0].mxu0 %v1332
    %v1474 = vpop.f32.mrb[0].mxu0
    %v1475 = vadd.f32 %v1366, %v1474
    %v1476 = vpop.f32.mrb[0].mxu0
    %v1477 = vpop.f32.mrb[0].mxu0
    %v1478 = vadd.f32 %v1366, %v1477
    %v1479 = vpop.f32.mrb[0].mxu0
    %1480 = vmatprep.mubr.bf16.mxu0 0
    %1481 = vmatmul.mubr.bf16.gmra.mrb[0].mxu0 %v1333
    %v1482 = vpop.f32.mrb[0].mxu0
    %v1483 = vadd.f32 %v1366, %v1482
    %v1484 = vpop.f32.mrb[0].mxu0
    %v1485 = vpop.f32.mrb[0].mxu0
    %v1486 = vadd.f32 %v1366, %v1485
    %v1487 = vpop.f32.mrb[0].mxu0
    %1488 = vmatprep.mubr.bf16.mxu0 0
    %1489 = vmatmul.mubr.bf16.gmra.mrb[0].mxu0 %v1334
    %v1490 = vpop.f32.mrb[0].mxu0
    %v1491 = vadd.f32 %v1366, %v1490
    %v1492 = vpop.f32.mrb[0].mxu0
    %v1493 = vpop.f32.mrb[0].mxu0
    %v1494 = vadd.f32 %v1366, %v1493
    %v1495 = vpop.f32.mrb[0].mxu0
    %1496 = vmatprep.mubr.bf16.mxu0 0
    %1497 = vmatmul.mubr.bf16.gmra.mrb[0].mxu0 %v1335
    %v1498 = vpop.f32.mrb[0].mxu0
    %v1499 = vadd.f32 %v1366, %v1498
    %v1500 = vpop.f32.mrb[0].mxu0
    %v1501 = vpop.f32.mrb[0].mxu0
    %v1502 = vadd.f32 %v1366, %v1501
    %v1503 = vpop.f32.mrb[0].mxu0
    %1504 = vmatprep.mubr.bf16.mxu0 0
    %1505 = vmatmul.mubr.bf16.gmra.mrb[0].mxu0 %v1336
    %v1506 = vpop.f32.mrb[0].mxu0
    %v1507 = vadd.f32 %v1366, %v1506
    %v1508 = vpop.f32.mrb[0].mxu0
    %v1509 = vpop.f32.mrb[0].mxu0
    %v1510 = vadd.f32 %v1366, %v1509
    %v1511 = vpop.f32.mrb[0].mxu0
    %1512 = vmatprep.mubr.bf16.mxu0 0
    %1513 = vmatmul.mubr.bf16.gmra.mrb[0].mxu0 %v1337
    %v1514 = vpop.f32.mrb[0].mxu0
    %v1515 = vadd.f32 %v1366, %v1514
    %v1516 = vpop.f32.mrb[0].mxu0
    %v1517 = vpop.f32.mrb[0].mxu0
    %v1518 = vadd.f32 %v1366, %v1517
    %v1519 = vpop.f32.mrb[0].mxu0
    %1520 = vmatprep.mubr.bf16.mxu0 0
    %1521 = vmatmul.mubr.bf16.gmra.mrb[0].mxu0 %v1338
    %v1522 = vpop.f32.mrb[0].mxu0
    %v1523 = vadd.f32 %v1366, %v1522
    %v1524 = vpop.f32.mrb[0].mxu0
    %v1525 = vpop.f32.mrb[0].mxu0
    %v1526 = vadd.f32 %v1366, %v1525
    %v1527 = vpop.f32.mrb[0].mxu0
    %1528 = vmatprep.mubr.bf16.mxu0 0
    %1529 = vmatmul.mubr.bf16.gmra.mrb[0].mxu0 %v1339
    %v1530 = vpop.f32.mrb[0].mxu0
    %v1531 = vadd.f32 %v1366, %v1530
    %v1532 = vpop.f32.mrb[0].mxu0
    %v1533 = vpop.f32.mrb[0].mxu0
    %v1534 = vadd.f32 %v1366, %v1533
    %v1535 = vpop.f32.mrb[0].mxu0
    %1536 = vmatprep.mubr.bf16.mxu0 0
    %1537 = vmatmul.mubr.bf16.gmra.mrb[0].mxu0 %v1340
    %v1538 = vpop.f32.mrb[0].mxu0
    %v1539 = vadd.f32 %v1366, %v1538
    %v1540 = vpop.f32.mrb[0].mxu0
    %v1541 = vpop.f32.mrb[0].mxu0
    %v1542 = vadd.f32 %v1366, %v1541
    %v1543 = vpop.f32.mrb[0].mxu0
    %1544 = vmatprep.mubr.bf16.mxu0 0
    %1545 = vmatmul.mubr.bf16.gmra.mrb[0].mxu0 %v1341
    %v1546 = vpop.f32.mrb[0].mxu0
    %v1547 = vadd.f32 %v1366, %v1546
    %v1548 = vpop.f32.mrb[0].mxu0
    %v1549 = vpop.f32.mrb[0].mxu0
    %v1550 = vadd.f32 %v1366, %v1549
    %v1551 = vpop.f32.mrb[0].mxu0
    %1552 = vmatprep.mubr.bf16.mxu0 0
    %1553 = vmatmul.mubr.bf16.gmra.mrb[0].mxu0 %v1342
    %v1554 = vpop.f32.mrb[0].mxu0
    %v1555 = vadd.f32 %v1366, %v1554
    %v1556 = vpop.f32.mrb[0].mxu0
    %v1557 = vpop.f32.mrb[0].mxu0
    %v1558 = vadd.f32 %v1366, %v1557
    %v1559 = vpop.f32.mrb[0].mxu0
    %1560 = vmatprep.mubr.bf16.mxu0 0
    %1561 = vmatmul.mubr.bf16.gmra.mrb[0].mxu0 %v1343
    %v1562 = vpop.f32.mrb[0].mxu0
    %v1563 = vadd.f32 %v1366, %v1562
    %v1564 = vpop.f32.mrb[0].mxu0
    %v1565 = vpop.f32.mrb[0].mxu0
    %v1566 = vadd.f32 %v1366, %v1565
    %v1567 = vpop.f32.mrb[0].mxu0
    %1568 = vmatprep.mubr.bf16.mxu0 0
    %1569 = vmatmul.mubr.bf16.gmra.mrb[0].mxu0 %v1344
    %v1570 = vpop.f32.mrb[0].mxu0
    %v1571 = vadd.f32 %v1366, %v1570
    %v1572 = vpop.f32.mrb[0].mxu0
    %v1573 = vpop.f32.mrb[0].mxu0
    %v1574 = vadd.f32 %v1366, %v1573
    %v1575 = vpop.f32.mrb[0].mxu0
    %1576 = vdwg.mxu0
    %v1577 = vmax.f32 %v1451, 0.0
    %v1578 = vmax.f32 %v1454, 0.0
    %v1579 = vmax.f32 %v1459, 0.0
    %v1580 = vmax.f32 %v1462, 0.0
    %v1581 = vmax.f32 %v1467, 0.0
    %v1582 = vmax.f32 %v1470, 0.0
    %v1583 = vmax.f32 %v1475, 0.0
    %v1584 = vmax.f32 %v1478, 0.0
    %v1585 = vmax.f32 %v1483, 0.0
    %v1586 = vmax.f32 %v1486, 0.0
    %v1587 = vmax.f32 %v1491, 0.0
    %v1588 = vmax.f32 %v1494, 0.0
    %v1589 = vmax.f32 %v1499, 0.0
    %v1590 = vmax.f32 %v1502, 0.0
    %v1591 = vmax.f32 %v1507, 0.0
    %v1592 = vmax.f32 %v1510, 0.0
    %v1593 = vmax.f32 %v1515, 0.0
    %v1594 = vmax.f32 %v1518, 0.0
    %v1595 = vmax.f32 %v1523, 0.0
    %v1596 = vmax.f32 %v1526, 0.0
    %v1597 = vmax.f32 %v1531, 0.0
    %v1598 = vmax.f32 %v1534, 0.0
    %v1599 = vmax.f32 %v1539, 0.0
    %v1600 = vmax.f32 %v1542, 0.0
    %v1601 = vmax.f32 %v1547, 0.0
    %v1602 = vmax.f32 %v1550, 0.0
    %v1603 = vmax.f32 %v1555, 0.0
    %v1604 = vmax.f32 %v1558, 0.0
    %v1605 = vmax.f32 %v1563, 0.0
    %v1606 = vmax.f32 %v1566, 0.0
    %v1607 = vmax.f32 %v1571, 0.0
    %v1608 = vmax.f32 %v1574, 0.0
    %v1609 = vpack.c.bf16 %v1578, %v1577
    %v1610 = vpack.c.bf16 %v1580, %v1579
    %v1611 = vpack.c.bf16 %v1582, %v1581
    %v1612 = vpack.c.bf16 %v1584, %v1583
    %v1613 = vpack.c.bf16 %v1586, %v1585
    %v1614 = vpack.c.bf16 %v1588, %v1587
    %v1615 = vpack.c.bf16 %v1590, %v1589
    %v1616 = vpack.c.bf16 %v1592, %v1591
    %v1617 = vpack.c.bf16 %v1594, %v1593
    %v1618 = vpack.c.bf16 %v1596, %v1595
    %v1619 = vpack.c.bf16 %v1598, %v1597
    %v1620 = vpack.c.bf16 %v1600, %v1599
    %v1621 = vpack.c.bf16 %v1602, %v1601
    %v1622 = vpack.c.bf16 %v1604, %v1603
    %v1623 = vpack.c.bf16 %v1606, %v1605
    %v1624 = vpack.c.bf16 %v1608, %v1607
    %v1625 = vld [vmem:[%s7] sm:$0xf]
    %v1626 = vld [vmem:[%s7 + $0x4] sm:$0xf]
    %v1627 = vld [vmem:[%s7 + $0x8] sm:$0xf]
    %v1628 = vld [vmem:[%s7 + $0xc] sm:$0xf]
    %v1629 = vld [vmem:[%s7 + $0x10] sm:$0xf]
    %v1630 = vld [vmem:[%s7 + $0x14] sm:$0xf]
    %v1631 = vld [vmem:[%s7 + $0x18] sm:$0xf]
    %v1632 = vld [vmem:[%s7 + $0x1c] sm:$0xf]
    %v1633 = vld [vmem:[%s7 + $0x20] sm:$0xf]
    %v1634 = vld [vmem:[%s7 + $0x24] sm:$0xf]
    %v1635 = vld [vmem:[%s7 + $0x28] sm:$0xf]
    %v1636 = vld [vmem:[%s7 + $0x2c] sm:$0xf]
    %v1637 = vld [vmem:[%s7 + $0x30] sm:$0xf]
    %v1638 = vld [vmem:[%s7 + $0x34] sm:$0xf]
    %v1639 = vld [vmem:[%s7 + $0x38] sm:$0xf]
    %v1640 = vld [vmem:[%s7 + $0x3c] sm:$0xf]
    %v1641 = vld [vmem:[%s8] sm:$0x1]
    %v1643 = vlaneseq
    %v1644 = vshrl.u32 %v1643, 7
    %v1645 = vsub.s32 0, %v1644
    %v1646 = vrot.slane %v1641, %v1645
    %v1664 = vunpack.c.l.b16 %v1625
    %v1665 = vunpack.c.l.b16 %v1626
    %v1666 = vunpack.c.l.b16 %v1627
    %v1667 = vunpack.c.l.b16 %v1628
    %v1668 = vunpack.c.l.b16 %v1629
    %v1669 = vunpack.c.l.b16 %v1630
    %v1670 = vunpack.c.l.b16 %v1631
    %v1671 = vunpack.c.l.b16 %v1632
    %v1672 = vunpack.c.l.b16 %v1633
    %v1673 = vunpack.c.l.b16 %v1634
    %v1674 = vunpack.c.l.b16 %v1635
    %v1675 = vunpack.c.l.b16 %v1636
    %v1676 = vunpack.c.l.b16 %v1637
    %v1677 = vunpack.c.l.b16 %v1638
    %v1678 = vunpack.c.l.b16 %v1639
    %v1679 = vunpack.c.l.b16 %v1640
    %v1680 = vpack.c.b16 %v1665, %v1664
    %v1681 = vpack.c.b16 %v1667, %v1666
    %v1682 = vpack.c.b16 %v1669, %v1668
    %v1683 = vpack.c.b16 %v1671, %v1670
    %v1684 = vpack.c.b16 %v1673, %v1672
    %v1685 = vpack.c.b16 %v1675, %v1674
    %v1686 = vpack.c.b16 %v1677, %v1676
    %v1687 = vpack.c.b16 %v1679, %v1678
    %1696 = vmatprep.subr.bf16.mxu0 0
    %1697 = vmatpush1.bf16.msra.mxu0 %v1680
    %1698 = vmatprep.subr.bf16.mxu0 0
    %1699 = vmatpush1.bf16.msra.mxu0 %v1681
    %1700 = vmatprep.subr.bf16.mxu0 0
    %1701 = vmatpush1.bf16.msra.mxu0 %v1682
    %1702 = vmatprep.subr.bf16.mxu0 0
    %1703 = vmatpush1.bf16.msra.mxu0 %v1683
    %1704 = vmatprep.subr.bf16.mxu0 0
    %1705 = vmatpush1.bf16.msra.mxu0 %v1684
    %1706 = vmatprep.subr.bf16.mxu0 0
    %1707 = vmatpush1.bf16.msra.mxu0 %v1685
    %1708 = vmatprep.subr.bf16.mxu0 0
    %1709 = vmatpush1.bf16.msra.mxu0 %v1686
    %1710 = vmatprep.subr.bf16.mxu0 0
    %1711 = vmatpush1.bf16.msra.mxu0 %v1687
    %1712 = vmatprep.subr.bf16.mxu0 0
    %1713 = vmatpush1.bf16.msra.mxu0 0
    %1714 = vmatprep.subr.bf16.mxu0 0
    %1715 = vmatpush1.bf16.msra.mxu0 0
    %1716 = vmatprep.subr.bf16.mxu0 0
    %1717 = vmatpush1.bf16.msra.mxu0 0
    %1718 = vmatprep.subr.bf16.mxu0 0
    %1719 = vmatpush1.bf16.msra.mxu0 0
    %1720 = vmatprep.subr.bf16.mxu0 0
    %1721 = vmatpush1.bf16.msra.mxu0 0
    %1722 = vmatprep.subr.bf16.mxu0 0
    %1723 = vmatpush1.bf16.msra.mxu0 0
    %1724 = vmatprep.subr.bf16.mxu0 0
    %1725 = vmatpush1.bf16.msra.mxu0 0
    %1726 = vmatprep.subr.bf16.mxu0 0
    %1727 = vmatpush1.bf16.msra.mxu0 0
    %1728 = vmatprep.mubr.bf16.mxu0 0
    %1729 = vmatmul.mubr.bf16.gmra.mrb[0].mxu0 %v1609
    %v1730 = vpop.f32.mrb[0].mxu0
    %v1731 = vadd.f32 %v1646, %v1730
    %v1732 = vpop.f32.mrb[0].mxu0
    %v1733 = vpop.f32.mrb[0].mxu0
    %v1734 = vadd.f32 %v1646, %v1733
    %v1735 = vpop.f32.mrb[0].mxu0
    %1736 = vmatprep.mubr.bf16.mxu0 0
    %1737 = vmatmul.mubr.bf16.gmra.mrb[0].mxu0 %v1610
    %v1738 = vpop.f32.mrb[0].mxu0
    %v1739 = vadd.f32 %v1646, %v1738
    %v1740 = vpop.f32.mrb[0].mxu0
    %v1741 = vpop.f32.mrb[0].mxu0
    %v1742 = vadd.f32 %v1646, %v1741
    %v1743 = vpop.f32.mrb[0].mxu0
    %1744 = vmatprep.mubr.bf16.mxu0 0
    %1745 = vmatmul.mubr.bf16.gmra.mrb[0].mxu0 %v1611
    %v1746 = vpop.f32.mrb[0].mxu0
    %v1747 = vadd.f32 %v1646, %v1746
    %v1748 = vpop.f32.mrb[0].mxu0
    %v1749 = vpop.f32.mrb[0].mxu0
    %v1750 = vadd.f32 %v1646, %v1749
    %v1751 = vpop.f32.mrb[0].mxu0
    %1752 = vmatprep.mubr.bf16.mxu0 0
    %1753 = vmatmul.mubr.bf16.gmra.mrb[0].mxu0 %v1612
    %v1754 = vpop.f32.mrb[0].mxu0
    %v1755 = vadd.f32 %v1646, %v1754
    %v1756 = vpop.f32.mrb[0].mxu0
    %v1757 = vpop.f32.mrb[0].mxu0
    %v1758 = vadd.f32 %v1646, %v1757
    %v1759 = vpop.f32.mrb[0].mxu0
    %1760 = vmatprep.mubr.bf16.mxu0 0
    %1761 = vmatmul.mubr.bf16.gmra.mrb[0].mxu0 %v1613
    %v1762 = vpop.f32.mrb[0].mxu0
    %v1763 = vadd.f32 %v1646, %v1762
    %v1764 = vpop.f32.mrb[0].mxu0
    %v1765 = vpop.f32.mrb[0].mxu0
    %v1766 = vadd.f32 %v1646, %v1765
    %v1767 = vpop.f32.mrb[0].mxu0
    %1768 = vmatprep.mubr.bf16.mxu0 0
    %1769 = vmatmul.mubr.bf16.gmra.mrb[0].mxu0 %v1614
    %v1770 = vpop.f32.mrb[0].mxu0
    %v1771 = vadd.f32 %v1646, %v1770
    %v1772 = vpop.f32.mrb[0].mxu0
    %v1773 = vpop.f32.mrb[0].mxu0
    %v1774 = vadd.f32 %v1646, %v1773
    %v1775 = vpop.f32.mrb[0].mxu0
    %1776 = vmatprep.mubr.bf16.mxu0 0
    %1777 = vmatmul.mubr.bf16.gmra.mrb[0].mxu0 %v1615
    %v1778 = vpop.f32.mrb[0].mxu0
    %v1779 = vadd.f32 %v1646, %v1778
    %v1780 = vpop.f32.mrb[0].mxu0
    %v1781 = vpop.f32.mrb[0].mxu0
    %v1782 = vadd.f32 %v1646, %v1781
    %v1783 = vpop.f32.mrb[0].mxu0
    %1784 = vmatprep.mubr.bf16.mxu0 0
    %1785 = vmatmul.mubr.bf16.gmra.mrb[0].mxu0 %v1616
    %v1786 = vpop.f32.mrb[0].mxu0
    %v1787 = vadd.f32 %v1646, %v1786
    %v1788 = vpop.f32.mrb[0].mxu0
    %v1789 = vpop.f32.mrb[0].mxu0
    %v1790 = vadd.f32 %v1646, %v1789
    %v1791 = vpop.f32.mrb[0].mxu0
    %1792 = vmatprep.mubr.bf16.mxu0 0
    %1793 = vmatmul.mubr.bf16.gmra.mrb[0].mxu0 %v1617
    %v1794 = vpop.f32.mrb[0].mxu0
    %v1795 = vadd.f32 %v1646, %v1794
    %v1796 = vpop.f32.mrb[0].mxu0
    %v1797 = vpop.f32.mrb[0].mxu0
    %v1798 = vadd.f32 %v1646, %v1797
    %v1799 = vpop.f32.mrb[0].mxu0
    %1800 = vmatprep.mubr.bf16.mxu0 0
    %1801 = vmatmul.mubr.bf16.gmra.mrb[0].mxu0 %v1618
    %v1802 = vpop.f32.mrb[0].mxu0
    %v1803 = vadd.f32 %v1646, %v1802
    %v1804 = vpop.f32.mrb[0].mxu0
    %v1805 = vpop.f32.mrb[0].mxu0
    %v1806 = vadd.f32 %v1646, %v1805
    %v1807 = vpop.f32.mrb[0].mxu0
    %1808 = vmatprep.mubr.bf16.mxu0 0
    %1809 = vmatmul.mubr.bf16.gmra.mrb[0].mxu0 %v1619
    %v1810 = vpop.f32.mrb[0].mxu0
    %v1811 = vadd.f32 %v1646, %v1810
    %v1812 = vpop.f32.mrb[0].mxu0
    %v1813 = vpop.f32.mrb[0].mxu0
    %v1814 = vadd.f32 %v1646, %v1813
    %v1815 = vpop.f32.mrb[0].mxu0
    %1816 = vmatprep.mubr.bf16.mxu0 0
    %1817 = vmatmul.mubr.bf16.gmra.mrb[0].mxu0 %v1620
    %v1818 = vpop.f32.mrb[0].mxu0
    %v1819 = vadd.f32 %v1646, %v1818
    %v1820 = vpop.f32.mrb[0].mxu0
    %v1821 = vpop.f32.mrb[0].mxu0
    %v1822 = vadd.f32 %v1646, %v1821
    %v1823 = vpop.f32.mrb[0].mxu0
    %1824 = vmatprep.mubr.bf16.mxu0 0
    %1825 = vmatmul.mubr.bf16.gmra.mrb[0].mxu0 %v1621
    %v1826 = vpop.f32.mrb[0].mxu0
    %v1827 = vadd.f32 %v1646, %v1826
    %v1828 = vpop.f32.mrb[0].mxu0
    %v1829 = vpop.f32.mrb[0].mxu0
    %v1830 = vadd.f32 %v1646, %v1829
    %v1831 = vpop.f32.mrb[0].mxu0
    %1832 = vmatprep.mubr.bf16.mxu0 0
    %1833 = vmatmul.mubr.bf16.gmra.mrb[0].mxu0 %v1622
    %v1834 = vpop.f32.mrb[0].mxu0
    %v1835 = vadd.f32 %v1646, %v1834
    %v1836 = vpop.f32.mrb[0].mxu0
    %v1837 = vpop.f32.mrb[0].mxu0
    %v1838 = vadd.f32 %v1646, %v1837
    %v1839 = vpop.f32.mrb[0].mxu0
    %1840 = vmatprep.mubr.bf16.mxu0 0
    %1841 = vmatmul.mubr.bf16.gmra.mrb[0].mxu0 %v1623
    %v1842 = vpop.f32.mrb[0].mxu0
    %v1843 = vadd.f32 %v1646, %v1842
    %v1844 = vpop.f32.mrb[0].mxu0
    %v1845 = vpop.f32.mrb[0].mxu0
    %v1846 = vadd.f32 %v1646, %v1845
    %v1847 = vpop.f32.mrb[0].mxu0
    %1848 = vmatprep.mubr.bf16.mxu0 0
    %1849 = vmatmul.mubr.bf16.gmra.mrb[0].mxu0 %v1624
    %v1850 = vpop.f32.mrb[0].mxu0
    %v1851 = vadd.f32 %v1646, %v1850
    %v1852 = vpop.f32.mrb[0].mxu0
    %v1853 = vpop.f32.mrb[0].mxu0
    %v1854 = vadd.f32 %v1646, %v1853
    %v1855 = vpop.f32.mrb[0].mxu0
    %1856 = vdwg.mxu0
    %1857 = vst [vmem:[%s9] sm:$0xff] %v1731
    %1858 = vst [vmem:[%s9 + $0x8] sm:$0xff] %v1734
    %1859 = vst [vmem:[%s9 + $0x10] sm:$0xff] %v1739
    %1860 = vst [vmem:[%s9 + $0x18] sm:$0xff] %v1742
    %1861 = vst [vmem:[%s9 + $0x20] sm:$0xff] %v1747
    %1862 = vst [vmem:[%s9 + $0x28] sm:$0xff] %v1750
    %1863 = vst [vmem:[%s9 + $0x30] sm:$0xff] %v1755
    %1864 = vst [vmem:[%s9 + $0x38] sm:$0xff] %v1758
    %1865 = vst [vmem:[%s9 + $0x40] sm:$0xff] %v1763
    %1866 = vst [vmem:[%s9 + $0x48] sm:$0xff] %v1766
    %1867 = vst [vmem:[%s9 + $0x50] sm:$0xff] %v1771
    %1868 = vst [vmem:[%s9 + $0x58] sm:$0xff] %v1774
    %1869 = vst [vmem:[%s9 + $0x60] sm:$0xff] %v1779
    %1870 = vst [vmem:[%s9 + $0x68] sm:$0xff] %v1782
    %1871 = vst [vmem:[%s9 + $0x70] sm:$0xff] %v1787
    %1872 = vst [vmem:[%s9 + $0x78] sm:$0xff] %v1790
    %1873 = vst [vmem:[%s9 + $0x80] sm:$0xff] %v1795
    %1874 = vst [vmem:[%s9 + $0x88] sm:$0xff] %v1798
    %1875 = vst [vmem:[%s9 + $0x90] sm:$0xff] %v1803
    %1876 = vst [vmem:[%s9 + $0x98] sm:$0xff] %v1806
    %1877 = vst [vmem:[%s9 + $0xa0] sm:$0xff] %v1811
    %1878 = vst [vmem:[%s9 + $0xa8] sm:$0xff] %v1814
    %1879 = vst [vmem:[%s9 + $0xb0] sm:$0xff] %v1819
    %1880 = vst [vmem:[%s9 + $0xb8] sm:$0xff] %v1822
    %1881 = vst [vmem:[%s9 + $0xc0] sm:$0xff] %v1827
    %1882 = vst [vmem:[%s9 + $0xc8] sm:$0xff] %v1830
    %1883 = vst [vmem:[%s9 + $0xd0] sm:$0xff] %v1835
    %1884 = vst [vmem:[%s9 + $0xd8] sm:$0xff] %v1838
    %1885 = vst [vmem:[%s9 + $0xe0] sm:$0xff] %v1843
    %1886 = vst [vmem:[%s9 + $0xe8] sm:$0xff] %v1846
    %1887 = vst [vmem:[%s9 + $0xf0] sm:$0xff] %v1851
    %1888 = vst [vmem:[%s9 + $0xf8] sm:$0xff] %v1854
  $region45: #{bilateral_roi_heads.1} parent=0 // pred_fallthru
    _
  // Predicated region
  $region46: #{bilateral_roi_heads.1} parent=0 // pred_check
    _
  $region47: #{bilateral_roi_heads.1} parent=0 // pred_check_branch
    %1890 = sbr.rel (0) target = $region49
  $region48: #{bilateral_roi_heads.1} parent=0 // pred_region
    _
  $region49: #{bilateral_roi_heads.1} parent=0 // pred_fallthru
    _
  // Predicated region
  $region50: #{bilateral_roi_heads.1} parent=0 // pred_check
    _
  $region51: #{bilateral_roi_heads.1} parent=0 // pred_check_branch
    %1892 = sbr.rel (0) target = $region53
  $region52: #{bilateral_roi_heads.1} parent=0 // pred_region
    _
  $region53: #{bilateral_roi_heads.1} parent=0 // pred_fallthru
    _

</llo_original>
